<compile_context>
chip_gen: v6e
topology: v6e:2x2x1
jax: 0.10.0
libtpu: 0.0.40
codegen_flags: <defaults>
</compile_context>

<pallas_src>
import functools

import jax
import jax.numpy as jnp
from jax.experimental import pallas as pl
from jax.experimental.pallas import tpu as pltpu


NC_PAD = 128  # lane-dense padded class dimension (multiple of 128)


# ----------------------------------------------------------------------------
# Fused kernel (one grid step == Bt images):
#   x_ref   : [Bt, H+2, W+2, Cin]  bf16   halo-padded NHWC image tile
#   wc_ref  : [9*Cin, Cout]        bf16   conv weight, tap-major / channel-minor
#   bc_ref  : [1, Cout]            f32
#   wh_ref  : [Cout, NC_PAD]       f32    (zero on padded classes)
#   bh_ref  : [1, NC_PAD]          f32    (-1e30 on padded classes)
#   o_ref   : [Bt, 1, NC_PAD]      f32    softmax scores (lane-dense)
# ----------------------------------------------------------------------------
def fused_conv_pool_head_kernel(x_ref, wc_ref, bc_ref, wh_ref, bh_ref, o_ref, *, H, W):
    Bt = x_ref.shape[0]
    Cin = x_ref.shape[3]
    Cout = wc_ref.shape[1]
    hw = H * W

    x = x_ref[...]                                   # [Bt, H+2, W+2, Cin] bf16

    # Conv as 9 accumulating K=Cin matmuls against the resident [9*Cin, Cout] weight.
    # The shifted slices are VMEM-local relayouts (no HBM im2col slab).
    acc = jnp.zeros((Bt * hw, Cout), jnp.float32)
    for t in range(9):                               # static unroll (3x3 taps)
        kh, kw = t // 3, t % 3
        tap = x[:, kh:kh + H, kw:kw + W, :].reshape(Bt * hw, Cin)
        acc = acc + jnp.dot(tap, wc_ref[t * Cin:(t + 1) * Cin, :],
                            preferred_element_type=jnp.float32)

    feat = jnp.maximum(acc + bc_ref[...], 0.0)       # [Bt*hw, Cout] f32

    # Global average pool: constant multiply instead of a divide.
    # (If hw ever reaches the thousands, switch this XLU reduction to a
    #  ones[1, hw] @ feat MXU matmul.)
    pooled = feat.reshape(Bt, hw, Cout).sum(axis=1) * (1.0 / hw)   # [Bt, Cout]

    # Tiny linear head (kept f32) + numerically stable softmax.
    logits = jnp.dot(pooled, wh_ref[...], preferred_element_type=jnp.float32)
    logits = logits + bh_ref[...]                    # padded classes -> -1e30
    m = jnp.max(logits, axis=-1, keepdims=True)
    e = jnp.exp(logits - m)
    s = jnp.sum(e, axis=-1, keepdims=True)
    probs = e * pl.reciprocal(s, approx=False)       # exact: scores sum to 1
    o_ref[...] = probs.reshape(Bt, 1, NC_PAD)


def _pick_block_batch(B, per_image_vmem_bytes, vmem_budget=8 << 20):
    """Largest batch tile Bt that (a) divides B, (b) leaves >= 2 grid steps when
    B >= 2 (so a v7x 2-TensorCore split has work), (c) stays under a conservative
    per-step VMEM budget (keeps the same code path valid on v7x's 64 MiB VMEM)."""
    best = 1
    for bt in range(1, B + 1):
        if B % bt != 0:
            continue
        if B >= 2 and B // bt < 2:
            continue
        if bt * per_image_vmem_bytes > vmem_budget:
            continue
        best = bt
    return best


# ----------------------------------------------------------------------------
# pallas_call wrapper: grid over batch tiles, full per-tile blocks (tiny shapes).
# ----------------------------------------------------------------------------
def fused_forward(x_pad, wc, bc, wh, bh, *, H, W, cin, cout):
    B, Hp, Wp, _ = x_pad.shape
    ncp = wh.shape[-1]
    hw = H * W
    cin9 = 9 * cin

    # Per-image VMEM estimate: double-buffered bf16 input block + f32 working set
    # (acc / feat / tap copies).  TODO(synk): for very large H*W (e.g. 512x512 on v7x)
    # add a grid axis over H*W with a pooled-sum scratch + pl.when finalize.
    per_image = 2 * (Hp * Wp * cin * 2) + 3 * (hw * cout * 4)
    Bt = _pick_block_batch(B, per_image)
    steps = B // Bt

    flops = int(B * (2 * hw * cin9 * cout      # conv (9 accumulating matmuls)
                     + 4 * hw * cout           # bias + relu + pool
                     + 2 * cout * ncp))        # head matmul
    bytes_accessed = int(
        x_pad.size * x_pad.dtype.itemsize      # raw padded image (no 9x im2col slab)
        + wc.size * wc.dtype.itemsize
        + (bc.size + wh.size + bh.size) * 4
        + B * ncp * 4)

    kernel = functools.partial(fused_conv_pool_head_kernel, H=H, W=W)

    return pl.pallas_call(
        kernel,
        out_shape=jax.ShapeDtypeStruct((B, 1, ncp), jnp.float32),
        grid=(steps,),
        in_specs=[
            pl.BlockSpec((Bt, Hp, Wp, cin), lambda b: (b, 0, 0, 0)),
            # Constant block index -> fetched once, pipeline skips re-fetch afterwards.
            pl.BlockSpec((cin9, cout), lambda b: (0, 0)),
            pl.BlockSpec((1, cout), lambda b: (0, 0)),
            pl.BlockSpec((cout, ncp), lambda b: (0, 0)),
            pl.BlockSpec((1, ncp), lambda b: (0, 0)),
        ],
        out_specs=pl.BlockSpec((Bt, 1, ncp), lambda b: (b, 0, 0)),
        compiler_params=pltpu.CompilerParams(
            # Batch axis is independent.  TODO(synk): on v7x switch this to
            # pltpu.CORE_PARALLEL for a guaranteed 2-TensorCore split; PARALLEL is
            # kept here for compile portability on single-core v5e/v6e parts.
            dimension_semantics=(pltpu.PARALLEL,),
        ),
        cost_estimate=pl.CostEstimate(
            flops=flops, transcendentals=B * ncp, bytes_accessed=bytes_accessed
        ),
    )(x_pad, wc, bc, wh, bh)


# ----------------------------------------------------------------------------
# JAX-side equivalent of JITRuntimeModel.forward(data_dict)
# ----------------------------------------------------------------------------
class JITRuntimeModelPallas:
    def __init__(self, cin=4, cout=32, num_classes=8, seed=0):
        k1, k2, k3, k4 = jax.random.split(jax.random.PRNGKey(seed), 4)
        self.cin, self.cout, self.num_classes = cin, cout, num_classes
        # Deterministic synthetic parameters (stand-in for the jit checkpoint).
        self.w_conv = jax.random.normal(k1, (3, 3, cin, cout), jnp.float32) * 0.1
        self.b_conv = jax.random.normal(k2, (1, cout), jnp.float32) * 0.01
        self.w_head = jax.random.normal(k3, (cout, num_classes), jnp.float32) * 0.1
        self.b_head = jax.random.normal(k4, (1, num_classes), jnp.float32) * 0.01

        # Kernel-side parameter packing (done once):
        #  - conv weight flattened to [9*Cin, Cout], tap-major / channel-minor,
        #    matching the in-kernel tap order (bf16 for the MXU)
        #  - head padded to a lane-dense NC_PAD class axis; padded classes get a large
        #    negative bias so the softmax over real classes is unchanged.
        self._wc = self.w_conv.reshape(9 * cin, cout).astype(jnp.bfloat16)
        self._bc = self.b_conv
        self._wh = jnp.zeros((cout, NC_PAD), jnp.float32).at[:, :num_classes].set(
            self.w_head)
        self._bh = jnp.full((1, NC_PAD), -1e30, jnp.float32).at[:, :num_classes].set(
            self.b_head)

    @functools.partial(jax.jit, static_argnums=0)
    def _model(self, img_nchw):
        B, Cin, H, W = img_nchw.shape
        # NCHW (PyTorch) -> NHWC; bf16 activations for the MXU (f32 accumulation).
        # Only the halo-padded image goes to HBM -- no im2col expansion.
        x = jnp.transpose(img_nchw, (0, 2, 3, 1)).astype(jnp.bfloat16)
        x_pad = jnp.pad(x, ((0, 0), (1, 1), (1, 1), (0, 0)))      # [B, H+2, W+2, Cin]
        scores_padded = fused_forward(
            x_pad, self._wc, self._bc, self._wh, self._bh,
            H=H, W=W, cin=Cin, cout=self.cout)
        return scores_padded.reshape(B, NC_PAD)[:, :self.num_classes]

    def forward(self, data_dict):
        img, img_metas = data_dict["img"], data_dict["img_metas"]
        scores = self._model(img)
        # postprocess: softmax scores -> labels/scores per image, keep metas.
        ret_dict = {
            "scores": scores,
            "labels": jnp.argmax(scores, axis=-1),
            "img_metas": img_metas,
        }
        return ret_dict

    __call__ = forward


# ----------------------------------------------------------------------------
# Pure-JAX reference (bf16-rounded inputs like the kernel, f32 math).
# ----------------------------------------------------------------------------
def reference_scores(img_nchw, model):
    x = jnp.transpose(img_nchw, (0, 2, 3, 1)).astype(jnp.bfloat16).astype(jnp.float32)
    w = model.w_conv.astype(jnp.bfloat16).astype(jnp.float32)
    y = jax.lax.conv_general_dilated(
        x, w, window_strides=(1, 1), padding="SAME",
        dimension_numbers=("NHWC", "HWIO", "NHWC"))
    y = jnp.maximum(y + model.b_conv.reshape(1, 1, 1, -1), 0.0)
    pooled = jnp.mean(y, axis=(1, 2))
    logits = pooled @ model.w_head + model.b_head
    return jax.nn.softmax(logits, axis=-1)


if __name__ == "__main__":
    key = jax.random.PRNGKey(0)
    B, C, H, W = 2, 4, 16, 16
    img = jax.random.normal(key, (B, C, H, W), jnp.float32)   # NCHW like PyTorch
    img_metas = [{"scale_factor": 1.0, "ori_shape": (H, W)} for _ in range(B)]
    data_dict = {"img": img, "img_metas": img_metas}

    model = JITRuntimeModelPallas(cin=C, cout=32, num_classes=8, seed=0)
    ret = model(data_dict)
    scores = jax.block_until_ready(ret["scores"])

    ref = reference_scores(img, model)
    assert scores.shape == (B, 8)
    assert jnp.allclose(scores, ref, atol=2e-3, rtol=2e-3), "mismatch vs reference"

    print("KERNEL_OK")
</pallas_src>

<mosaic_0001>
module attributes {stable_mosaic.version = 11 : i64} {
  func.func @fused_conv_pool_head_kernel(%arg0: i32, %arg1: memref<1x18x18x4xbf16, #tpu.memory_space<vmem>>, %arg2: memref<36x32xbf16, #tpu.memory_space<vmem>>, %arg3: memref<1x32xf32, #tpu.memory_space<vmem>>, %arg4: memref<32x128xf32, #tpu.memory_space<vmem>>, %arg5: memref<1x128xf32, #tpu.memory_space<vmem>>, %arg6: memref<1x1x128xf32, #tpu.memory_space<vmem>>) attributes {dimension_semantics = [#tpu.dimension_semantics<parallel>], iteration_bounds = array<i64: 2>, scalar_prefetch = 0 : i64, scratch_operands = 0 : i64, tpu.core_type = #tpu.core_type<tc>, window_params = [{transform_indices = @transform_0, window_bounds = array<i64: 1, 18, 18, 4>}, {pipeline_mode = #tpu.pipeline_mode<synchronous>, transform_indices = @transform_1, window_bounds = array<i64: 36, 32>}, {pipeline_mode = #tpu.pipeline_mode<synchronous>, transform_indices = @transform_2, window_bounds = array<i64: 1, 32>}, {pipeline_mode = #tpu.pipeline_mode<synchronous>, transform_indices = @transform_3, window_bounds = array<i64: 32, 128>}, {pipeline_mode = #tpu.pipeline_mode<synchronous>, transform_indices = @transform_4, window_bounds = array<i64: 1, 128>}, {transform_indices = @transform_5, window_bounds = array<i64: 1, 1, 128>}]} {
    %c0 = arith.constant 0 : index
    %c0_0 = arith.constant 0 : index
    %c0_1 = arith.constant 0 : index
    %c0_2 = arith.constant 0 : index
    %0 = vector.load %arg1[%c0, %c0_0, %c0_1, %c0_2] : memref<1x18x18x4xbf16, #tpu.memory_space<vmem>>, vector<1x18x18x4xbf16>
    %cst = arith.constant 0.000000e+00 : f32
    %1 = vector.broadcast %cst : f32 to vector<256x32xf32>
    %2 = vector.extract_strided_slice %0 {offsets = [0, 0, 0, 0], sizes = [1, 16, 16, 4], strides = [1, 1, 1, 1]} : vector<1x18x18x4xbf16> to vector<1x16x16x4xbf16>
    %3 = vector.shape_cast %2 : vector<1x16x16x4xbf16> to vector<256x4xbf16>
    %c0_3 = arith.constant 0 : index
    %c0_4 = arith.constant 0 : index
    %4 = vector.load %arg2[%c0_3, %c0_4] : memref<36x32xbf16, #tpu.memory_space<vmem>>, vector<4x32xbf16>
    %cst_5 = arith.constant dense<0.000000e+00> : vector<256x32xf32>
    %5 = tpu.matmul %3, %4, %cst_5 {dimension_numbers = #tpu.dot_dimension_numbers<[1], [0], [0], [1], [0, 0, 1, 1], [], []>} : vector<256x4xbf16>, vector<4x32xbf16>, vector<256x32xf32> -> vector<256x32xf32>
    %6 = arith.addf %1, %5 : vector<256x32xf32>
    %7 = vector.extract_strided_slice %0 {offsets = [0, 0, 1, 0], sizes = [1, 16, 16, 4], strides = [1, 1, 1, 1]} : vector<1x18x18x4xbf16> to vector<1x16x16x4xbf16>
    %8 = vector.shape_cast %7 : vector<1x16x16x4xbf16> to vector<256x4xbf16>
    %c4 = arith.constant 4 : index
    %c0_6 = arith.constant 0 : index
    %9 = vector.load %arg2[%c4, %c0_6] : memref<36x32xbf16, #tpu.memory_space<vmem>>, vector<4x32xbf16>
    %cst_7 = arith.constant dense<0.000000e+00> : vector<256x32xf32>
    %10 = tpu.matmul %8, %9, %cst_7 {dimension_numbers = #tpu.dot_dimension_numbers<[1], [0], [0], [1], [0, 0, 1, 1], [], []>} : vector<256x4xbf16>, vector<4x32xbf16>, vector<256x32xf32> -> vector<256x32xf32>
    %11 = arith.addf %6, %10 : vector<256x32xf32>
    %12 = vector.extract_strided_slice %0 {offsets = [0, 0, 2, 0], sizes = [1, 16, 16, 4], strides = [1, 1, 1, 1]} : vector<1x18x18x4xbf16> to vector<1x16x16x4xbf16>
    %13 = vector.shape_cast %12 : vector<1x16x16x4xbf16> to vector<256x4xbf16>
    %c8 = arith.constant 8 : index
    %c0_8 = arith.constant 0 : index
    %14 = vector.load %arg2[%c8, %c0_8] : memref<36x32xbf16, #tpu.memory_space<vmem>>, vector<4x32xbf16>
    %cst_9 = arith.constant dense<0.000000e+00> : vector<256x32xf32>
    %15 = tpu.matmul %13, %14, %cst_9 {dimension_numbers = #tpu.dot_dimension_numbers<[1], [0], [0], [1], [0, 0, 1, 1], [], []>} : vector<256x4xbf16>, vector<4x32xbf16>, vector<256x32xf32> -> vector<256x32xf32>
    %16 = arith.addf %11, %15 : vector<256x32xf32>
    %17 = vector.extract_strided_slice %0 {offsets = [0, 1, 0, 0], sizes = [1, 16, 16, 4], strides = [1, 1, 1, 1]} : vector<1x18x18x4xbf16> to vector<1x16x16x4xbf16>
    %18 = vector.shape_cast %17 : vector<1x16x16x4xbf16> to vector<256x4xbf16>
    %c12 = arith.constant 12 : index
    %c0_10 = arith.constant 0 : index
    %19 = vector.load %arg2[%c12, %c0_10] : memref<36x32xbf16, #tpu.memory_space<vmem>>, vector<4x32xbf16>
    %cst_11 = arith.constant dense<0.000000e+00> : vector<256x32xf32>
    %20 = tpu.matmul %18, %19, %cst_11 {dimension_numbers = #tpu.dot_dimension_numbers<[1], [0], [0], [1], [0, 0, 1, 1], [], []>} : vector<256x4xbf16>, vector<4x32xbf16>, vector<256x32xf32> -> vector<256x32xf32>
    %21 = arith.addf %16, %20 : vector<256x32xf32>
    %22 = vector.extract_strided_slice %0 {offsets = [0, 1, 1, 0], sizes = [1, 16, 16, 4], strides = [1, 1, 1, 1]} : vector<1x18x18x4xbf16> to vector<1x16x16x4xbf16>
    %23 = vector.shape_cast %22 : vector<1x16x16x4xbf16> to vector<256x4xbf16>
    %c16 = arith.constant 16 : index
    %c0_12 = arith.constant 0 : index
    %24 = vector.load %arg2[%c16, %c0_12] : memref<36x32xbf16, #tpu.memory_space<vmem>>, vector<4x32xbf16>
    %cst_13 = arith.constant dense<0.000000e+00> : vector<256x32xf32>
    %25 = tpu.matmul %23, %24, %cst_13 {dimension_numbers = #tpu.dot_dimension_numbers<[1], [0], [0], [1], [0, 0, 1, 1], [], []>} : vector<256x4xbf16>, vector<4x32xbf16>, vector<256x32xf32> -> vector<256x32xf32>
    %26 = arith.addf %21, %25 : vector<256x32xf32>
    %27 = vector.extract_strided_slice %0 {offsets = [0, 1, 2, 0], sizes = [1, 16, 16, 4], strides = [1, 1, 1, 1]} : vector<1x18x18x4xbf16> to vector<1x16x16x4xbf16>
    %28 = vector.shape_cast %27 : vector<1x16x16x4xbf16> to vector<256x4xbf16>
    %c20 = arith.constant 20 : index
    %c0_14 = arith.constant 0 : index
    %29 = vector.load %arg2[%c20, %c0_14] : memref<36x32xbf16, #tpu.memory_space<vmem>>, vector<4x32xbf16>
    %cst_15 = arith.constant dense<0.000000e+00> : vector<256x32xf32>
    %30 = tpu.matmul %28, %29, %cst_15 {dimension_numbers = #tpu.dot_dimension_numbers<[1], [0], [0], [1], [0, 0, 1, 1], [], []>} : vector<256x4xbf16>, vector<4x32xbf16>, vector<256x32xf32> -> vector<256x32xf32>
    %31 = arith.addf %26, %30 : vector<256x32xf32>
    %32 = vector.extract_strided_slice %0 {offsets = [0, 2, 0, 0], sizes = [1, 16, 16, 4], strides = [1, 1, 1, 1]} : vector<1x18x18x4xbf16> to vector<1x16x16x4xbf16>
    %33 = vector.shape_cast %32 : vector<1x16x16x4xbf16> to vector<256x4xbf16>
    %c24 = arith.constant 24 : index
    %c0_16 = arith.constant 0 : index
    %34 = vector.load %arg2[%c24, %c0_16] : memref<36x32xbf16, #tpu.memory_space<vmem>>, vector<4x32xbf16>
    %cst_17 = arith.constant dense<0.000000e+00> : vector<256x32xf32>
    %35 = tpu.matmul %33, %34, %cst_17 {dimension_numbers = #tpu.dot_dimension_numbers<[1], [0], [0], [1], [0, 0, 1, 1], [], []>} : vector<256x4xbf16>, vector<4x32xbf16>, vector<256x32xf32> -> vector<256x32xf32>
    %36 = arith.addf %31, %35 : vector<256x32xf32>
    %37 = vector.extract_strided_slice %0 {offsets = [0, 2, 1, 0], sizes = [1, 16, 16, 4], strides = [1, 1, 1, 1]} : vector<1x18x18x4xbf16> to vector<1x16x16x4xbf16>
    %38 = vector.shape_cast %37 : vector<1x16x16x4xbf16> to vector<256x4xbf16>
    %c28 = arith.constant 28 : index
    %c0_18 = arith.constant 0 : index
    %39 = vector.load %arg2[%c28, %c0_18] : memref<36x32xbf16, #tpu.memory_space<vmem>>, vector<4x32xbf16>
    %cst_19 = arith.constant dense<0.000000e+00> : vector<256x32xf32>
    %40 = tpu.matmul %38, %39, %cst_19 {dimension_numbers = #tpu.dot_dimension_numbers<[1], [0], [0], [1], [0, 0, 1, 1], [], []>} : vector<256x4xbf16>, vector<4x32xbf16>, vector<256x32xf32> -> vector<256x32xf32>
    %41 = arith.addf %36, %40 : vector<256x32xf32>
    %42 = vector.extract_strided_slice %0 {offsets = [0, 2, 2, 0], sizes = [1, 16, 16, 4], strides = [1, 1, 1, 1]} : vector<1x18x18x4xbf16> to vector<1x16x16x4xbf16>
    %43 = vector.shape_cast %42 : vector<1x16x16x4xbf16> to vector<256x4xbf16>
    %c32 = arith.constant 32 : index
    %c0_20 = arith.constant 0 : index
    %44 = vector.load %arg2[%c32, %c0_20] : memref<36x32xbf16, #tpu.memory_space<vmem>>, vector<4x32xbf16>
    %cst_21 = arith.constant dense<0.000000e+00> : vector<256x32xf32>
    %45 = tpu.matmul %43, %44, %cst_21 {dimension_numbers = #tpu.dot_dimension_numbers<[1], [0], [0], [1], [0, 0, 1, 1], [], []>} : vector<256x4xbf16>, vector<4x32xbf16>, vector<256x32xf32> -> vector<256x32xf32>
    %46 = arith.addf %41, %45 : vector<256x32xf32>
    %c0_22 = arith.constant 0 : index
    %c0_23 = arith.constant 0 : index
    %47 = vector.load %arg3[%c0_22, %c0_23] : memref<1x32xf32, #tpu.memory_space<vmem>>, vector<1x32xf32>
    %48 = vector.broadcast %47 : vector<1x32xf32> to vector<256x32xf32>
    %49 = arith.addf %46, %48 : vector<256x32xf32>
    %cst_24 = arith.constant 0.000000e+00 : f32
    %50 = vector.broadcast %cst_24 : f32 to vector<256x32xf32>
    %51 = arith.maximumf %49, %50 : vector<256x32xf32>
    %52 = vector.shape_cast %51 : vector<256x32xf32> to vector<1x256x32xf32>
    %cst_25 = arith.constant dense<0.000000e+00> : vector<1x32xf32>
    %53 = vector.multi_reduction <add>, %52, %cst_25 [1] : vector<1x256x32xf32> to vector<1x32xf32>
    %cst_26 = arith.constant 3.906250e-03 : f32
    %54 = vector.broadcast %cst_26 : f32 to vector<1x32xf32>
    %55 = arith.mulf %53, %54 : vector<1x32xf32>
    %c0_27 = arith.constant 0 : index
    %c0_28 = arith.constant 0 : index
    %56 = vector.load %arg4[%c0_27, %c0_28] : memref<32x128xf32, #tpu.memory_space<vmem>>, vector<32x128xf32>
    %cst_29 = arith.constant dense<0.000000e+00> : vector<1x128xf32>
    %57 = tpu.matmul %55, %56, %cst_29 {dimension_numbers = #tpu.dot_dimension_numbers<[1], [0], [0], [1], [0, 0, 1, 1], [], []>} : vector<1x32xf32>, vector<32x128xf32>, vector<1x128xf32> -> vector<1x128xf32>
    %c0_30 = arith.constant 0 : index
    %c0_31 = arith.constant 0 : index
    %58 = vector.load %arg5[%c0_30, %c0_31] : memref<1x128xf32, #tpu.memory_space<vmem>>, vector<1x128xf32>
    %59 = arith.addf %57, %58 : vector<1x128xf32>
    %cst_32 = arith.constant dense<0xFF800000> : vector<1xf32>
    %60 = vector.multi_reduction <maximumf>, %59, %cst_32 [1] : vector<1x128xf32> to vector<1xf32>
    %61 = vector.shape_cast %60 : vector<1xf32> to vector<1x1xf32>
    %62 = vector.broadcast %61 : vector<1x1xf32> to vector<1x128xf32>
    %63 = arith.subf %59, %62 : vector<1x128xf32>
    %64 = math.exp %63 : vector<1x128xf32>
    %cst_33 = arith.constant dense<0.000000e+00> : vector<1xf32>
    %65 = vector.multi_reduction <add>, %64, %cst_33 [1] : vector<1x128xf32> to vector<1xf32>
    %66 = vector.shape_cast %65 : vector<1xf32> to vector<1x1xf32>
    %67 = tpu.reciprocal %66 : vector<1x1xf32> -> vector<1x1xf32>
    %68 = vector.broadcast %67 : vector<1x1xf32> to vector<1x128xf32>
    %69 = arith.mulf %64, %68 : vector<1x128xf32>
    %70 = vector.shape_cast %69 : vector<1x128xf32> to vector<1x1x128xf32>
    %c0_34 = arith.constant 0 : index
    %c0_35 = arith.constant 0 : index
    %c0_36 = arith.constant 0 : index
    %71 = vector.load %arg6[%c0_34, %c0_35, %c0_36] : memref<1x1x128xf32, #tpu.memory_space<vmem>>, vector<1x1x128xf32>
    tpu.vector_store %arg6[%c0_34, %c0_35, %c0_36], %70 {strides = array<i32>} : memref<1x1x128xf32, #tpu.memory_space<vmem>>, vector<1x1x128xf32>,
    return
  }
  func.func @transform_0(%arg0: i32) -> (i32, i32, i32, i32) {
    %c0_i32 = arith.constant 0 : i32
    %c0_i32_0 = arith.constant 0 : i32
    %c0_i32_1 = arith.constant 0 : i32
    %c0_i32_2 = arith.constant 0 : i32
    return %arg0, %c0_i32, %c0_i32_0, %c0_i32_1 : i32, i32, i32, i32
  }
  func.func @transform_1(%arg0: i32) -> (i32, i32) {
    %c0_i32 = arith.constant 0 : i32
    %c0_i32_0 = arith.constant 0 : i32
    %c0_i32_1 = arith.constant 0 : i32
    return %c0_i32, %c0_i32_0 : i32, i32
  }
  func.func @transform_2(%arg0: i32) -> (i32, i32) {
    %c0_i32 = arith.constant 0 : i32
    %c0_i32_0 = arith.constant 0 : i32
    %c0_i32_1 = arith.constant 0 : i32
    return %c0_i32, %c0_i32_0 : i32, i32
  }
  func.func @transform_3(%arg0: i32) -> (i32, i32) {
    %c0_i32 = arith.constant 0 : i32
    %c0_i32_0 = arith.constant 0 : i32
    %c0_i32_1 = arith.constant 0 : i32
    return %c0_i32, %c0_i32_0 : i32, i32
  }
  func.func @transform_4(%arg0: i32) -> (i32, i32) {
    %c0_i32 = arith.constant 0 : i32
    %c0_i32_0 = arith.constant 0 : i32
    %c0_i32_1 = arith.constant 0 : i32
    return %c0_i32, %c0_i32_0 : i32, i32
  }
  func.func @transform_5(%arg0: i32) -> (i32, i32, i32) {
    %c0_i32 = arith.constant 0 : i32
    %c0_i32_0 = arith.constant 0 : i32
    %c0_i32_1 = arith.constant 0 : i32
    return %arg0, %c0_i32, %c0_i32_0 : i32, i32, i32
  }
}

</mosaic_0001>

<llo_original>
// kernel: _model.1
$region0: #{_model.1}
  #allocation0 [shape = 'u32[]', space=smem, size = 0x4, offset = 0x4, fixed_abs, tag = 'smem constant byte address 0x4 - core index']
  #allocation1 [shape = 'u32[144,128]{1,0:T(1,128)}', space=vmem, size = 0x12000, scoped, tag = 'internal scratch']
  %s0 = inlined_call_operand.vmem [shape: bf16[2,18,18,4], index: 0, kind: input, shape index: {}]
  %s1 = inlined_call_operand.vmem [shape: bf16[36,32], index: 1, kind: input, shape index: {}]
  %s2 = inlined_call_operand.vmem [shape: f32[1,32], index: 2, kind: input, shape index: {}]
  %s3 = inlined_call_operand.vmem [shape: f32[32,128], index: 3, kind: input, shape index: {}]
  %s4 = inlined_call_operand.vmem [shape: f32[1,128], index: 4, kind: input, shape index: {}]
  %s5 = inlined_call_operand.hbm [shape: f32[2,1,128], index: 5, kind: output, shape index: {}]
  %s6 = sld [smem:[#allocation0]]
  $region53: #{_model.1} parent=0
    _
  %s8 = ssub.s32 1, %s6
  %s9 = scalar_select 0, %s8, %s6
  $region1: #{_model.1} parent=0
    #allocation2 [shape = 'u8[1024]{0}', space=vmem, size = 0x400, scoped, tag = 'output window, operand 0']
    #allocation3 [shape = 's32[2]{0}', space=sflag, size = 0x8, scoped, tag = 'scoped memory for _model.1']
    %10 = vsyncpa [#allocation3], 0
    %s11 = scalar_lea.sflag [#allocation3], 1
    %12 = vsyncpa %s11, 0
    loop: start=0, step=1, limit=4
    $region2: #{_model.1} parent=1 // loop_pre_header
      _
    $region3: #{_model.1} parent=1 // loop_header
      %s14 = sphi 0, %s18
      %p15 = scmp.ge.s32.totalorder %s14, 4
      %s24 = sphi 0, %s26
      %s27 = sphi 0, %s24
      %s28 = sphi 0, %s27
      %s44 = sphi 0, %s28
      %s48 = sphi 0, %s48
      %s50 = sphi 0, %s48
      %s51 = sphi 0, %s50
      %s65 = sphi 0, %s51
      %s69 = sphi 0, %s69
      %s71 = sphi 0, %s69
      %s72 = sphi 0, %s71
      %s86 = sphi 0, %s72
      %s90 = sphi 0, %s90
      %s92 = sphi 0, %s90
      %s93 = sphi 0, %s92
      %s107 = sphi 0, %s93
      %s111 = sphi 0, %s111
      %s113 = sphi 0, %s111
      %s114 = sphi 0, %s113
      %s128 = sphi 0, %s114
      %s134 = sphi 0, %s136
      %s137 = sphi 0, %s134
      %s138 = sphi 0, %s137
      %s154 = sphi 0, %s138
    $region4: #{_model.1} parent=1 // loop_header_branch
      %17 = sbr.rel (%p15) target = $region8
    $region5: #{_model.1} parent=1 // loop_body
      %s19 = ssub.s32 %s14, 1
      %s20 = ssub.s32 %s14, 2
      %s21 = sadd.s32 %s14, 1
      %s22 = ssub.s32 %s14, %s21
      %p23 = scmp.eq.s32.totalorder %s22, 0
      %s25 = sadd.s32 %s24, 1
      %s26 = scalar_select %p23, %s24, %s25
      %p29 = pneg %p23
      %p30 = scmp.eq.s32.totalorder %s14, 1
      %p31 = por %p29, %p30
      %p32 = scmp.ne.s32.totalorder %s24, %s27
      %p33 = scmp.eq.s32.totalorder %s14, 0
      %p34 = por %p32, %p33
      %p35 = scmp.ne.s32.totalorder %s24, %s27
      %p36 = scmp.eq.s32.totalorder %s19, 1
      %p37 = por %p35, %p36
      %p38 = scmp.ne.s32.totalorder %s27, %s28
      %p39 = scmp.eq.s32.totalorder %s19, 0
      %p40 = por %p38, %p39
      %p41 = scmp.ne.s32.totalorder %s27, %s28
      %p42 = scmp.eq.s32.totalorder %s20, 1
      %p43 = por %p41, %p42
      %p45 = scmp.ne.s32.totalorder %s28, %s44
      %p46 = scmp.eq.s32.totalorder %s20, 0
      %p47 = por %p45, %p46
      %s49 = sadd.s32 %s48, 1
      %p52 = scmp.eq.s32.totalorder %s14, 1
      %p53 = scmp.ne.s32.totalorder %s48, %s50
      %p54 = scmp.eq.s32.totalorder %s14, 0
      %p55 = por %p53, %p54
      %p56 = scmp.ne.s32.totalorder %s48, %s50
      %p57 = scmp.eq.s32.totalorder %s19, 1
      %p58 = por %p56, %p57
      %p59 = scmp.ne.s32.totalorder %s50, %s51
      %p60 = scmp.eq.s32.totalorder %s19, 0
      %p61 = por %p59, %p60
      %p62 = scmp.ne.s32.totalorder %s50, %s51
      %p63 = scmp.eq.s32.totalorder %s20, 1
      %p64 = por %p62, %p63
      %p66 = scmp.ne.s32.totalorder %s51, %s65
      %p67 = scmp.eq.s32.totalorder %s20, 0
      %p68 = por %p66, %p67
      %s70 = sadd.s32 %s69, 1
      %p73 = scmp.eq.s32.totalorder %s14, 1
      %p74 = scmp.ne.s32.totalorder %s69, %s71
      %p75 = scmp.eq.s32.totalorder %s14, 0
      %p76 = por %p74, %p75
      %p77 = scmp.ne.s32.totalorder %s69, %s71
      %p78 = scmp.eq.s32.totalorder %s19, 1
      %p79 = por %p77, %p78
      %p80 = scmp.ne.s32.totalorder %s71, %s72
      %p81 = scmp.eq.s32.totalorder %s19, 0
      %p82 = por %p80, %p81
      %p83 = scmp.ne.s32.totalorder %s71, %s72
      %p84 = scmp.eq.s32.totalorder %s20, 1
      %p85 = por %p83, %p84
      %p87 = scmp.ne.s32.totalorder %s72, %s86
      %p88 = scmp.eq.s32.totalorder %s20, 0
      %p89 = por %p87, %p88
      %s91 = sadd.s32 %s90, 1
      %p94 = scmp.eq.s32.totalorder %s14, 1
      %p95 = scmp.ne.s32.totalorder %s90, %s92
      %p96 = scmp.eq.s32.totalorder %s14, 0
      %p97 = por %p95, %p96
      %p98 = scmp.ne.s32.totalorder %s90, %s92
      %p99 = scmp.eq.s32.totalorder %s19, 1
      %p100 = por %p98, %p99
      %p101 = scmp.ne.s32.totalorder %s92, %s93
      %p102 = scmp.eq.s32.totalorder %s19, 0
      %p103 = por %p101, %p102
      %p104 = scmp.ne.s32.totalorder %s92, %s93
      %p105 = scmp.eq.s32.totalorder %s20, 1
      %p106 = por %p104, %p105
      %p108 = scmp.ne.s32.totalorder %s93, %s107
      %p109 = scmp.eq.s32.totalorder %s20, 0
      %p110 = por %p108, %p109
      %s112 = sadd.s32 %s111, 1
      %p115 = scmp.eq.s32.totalorder %s14, 1
      %p116 = scmp.ne.s32.totalorder %s111, %s113
      %p117 = scmp.eq.s32.totalorder %s14, 0
      %p118 = por %p116, %p117
      %p119 = scmp.ne.s32.totalorder %s111, %s113
      %p120 = scmp.eq.s32.totalorder %s19, 1
      %p121 = por %p119, %p120
      %p122 = scmp.ne.s32.totalorder %s113, %s114
      %p123 = scmp.eq.s32.totalorder %s19, 0
      %p124 = por %p122, %p123
      %p125 = scmp.ne.s32.totalorder %s113, %s114
      %p126 = scmp.eq.s32.totalorder %s20, 1
      %p127 = por %p125, %p126
      %p129 = scmp.ne.s32.totalorder %s114, %s128
      %p130 = scmp.eq.s32.totalorder %s20, 0
      %p131 = por %p129, %p130
      %s132 = ssub.s32 %s14, %s21
      %p133 = scmp.eq.s32.totalorder %s132, 0
      %s135 = sadd.s32 %s134, 1
      %s136 = scalar_select %p133, %s134, %s135
      %p139 = pneg %p133
      %p140 = scmp.eq.s32.totalorder %s14, 1
      %p141 = por %p139, %p140
      %p142 = scmp.ne.s32.totalorder %s134, %s137
      %p143 = scmp.eq.s32.totalorder %s14, 0
      %p144 = por %p142, %p143
      %p145 = scmp.ne.s32.totalorder %s134, %s137
      %p146 = scmp.eq.s32.totalorder %s19, 1
      %p147 = por %p145, %p146
      %p148 = scmp.ne.s32.totalorder %s137, %s138
      %p149 = scmp.eq.s32.totalorder %s19, 0
      %p150 = por %p148, %p149
      %p151 = scmp.ne.s32.totalorder %s137, %s138
      %p152 = scmp.eq.s32.totalorder %s20, 1
      %p153 = por %p151, %p152
      %p155 = scmp.ne.s32.totalorder %s138, %s154
      %p156 = scmp.eq.s32.totalorder %s20, 0
      %p157 = por %p155, %p156
      %p158 = scmp.le.s32.totalorder 1, %s14
      %p159 = scmp.lt.s32.totalorder %s14, 3
      %p160 = pnand %p158, %p159
      %p161 = pneg %p160
      // Predicated region
      $region9: #{_model.1} parent=5 // pred_check
        _
      $region10: #{_model.1} parent=5 // pred_check_branch
        %163 = sbr.rel (%p160) target = $region12
      $region11: #{_model.1} parent=5 // pred_region
        %s164 = ssub.s32 %s14, 1
        // Predicated region
        $region13: #{_model.1} parent=11 // pred_check
          %p165 = pneg %p61
        $region14: #{_model.1} parent=11 // pred_check_branch
          %167 = sbr.rel (%p165) target = $region16
        $region15: #{_model.1} parent=11 // pred_region
          _
        $region16: #{_model.1} parent=11 // pred_fallthru
          _
        // Predicated region
        $region17: #{_model.1} parent=11 // pred_check
          %p168 = pneg %p82
        $region18: #{_model.1} parent=11 // pred_check_branch
          %170 = sbr.rel (%p168) target = $region20
        $region19: #{_model.1} parent=11 // pred_region
          _
        $region20: #{_model.1} parent=11 // pred_fallthru
          _
        // Predicated region
        $region21: #{_model.1} parent=11 // pred_check
          %p171 = pneg %p103
        $region22: #{_model.1} parent=11 // pred_check_branch
          %173 = sbr.rel (%p171) target = $region24
        $region23: #{_model.1} parent=11 // pred_region
          _
        $region24: #{_model.1} parent=11 // pred_fallthru
          _
        // Predicated region
        $region25: #{_model.1} parent=11 // pred_check
          %p174 = pneg %p124
        $region26: #{_model.1} parent=11 // pred_check_branch
          %176 = sbr.rel (%p174) target = $region28
        $region27: #{_model.1} parent=11 // pred_region
          _
        $region28: #{_model.1} parent=11 // pred_fallthru
          _
      $region12: #{_model.1} parent=5 // pred_fallthru
        _
      %p177 = scmp.lt.s32.totalorder %s14, 2
      // Predicated region
      $region29: #{_model.1} parent=5 // pred_check
        %p178 = pneg %p177
      $region30: #{_model.1} parent=5 // pred_check_branch
        %180 = sbr.rel (%p178) target = $region32
      $region31: #{_model.1} parent=5 // pred_region
        // Predicated region
        $region33: #{_model.1} parent=31 // pred_check
          %p181 = pneg %p34
        $region34: #{_model.1} parent=31 // pred_check_branch
          %183 = sbr.rel (%p181) target = $region36
        $region35: #{_model.1} parent=31 // pred_region
          %p184 = scmp.lt.s32.totalorder %s14, 1
          %s185 = scalar_select %p184, %s14, 1
          %s186 = smul.addr %s185, 54
          %s187 = smul.addr %s186, 4
          %s188 = scalar_lea.vmem %s0, %s187
        $region36: #{_model.1} parent=31 // pred_fallthru
          _
      $region32: #{_model.1} parent=5 // pred_fallthru
        _
      %p189 = scmp.le.s32.totalorder 1, %s14
      %p190 = scmp.lt.s32.totalorder %s14, 3
      %p191 = pnand %p189, %p190
      %p192 = pneg %p191
      // Predicated region
      $region37: #{_model.1} parent=5 // pred_check
        _
      $region38: #{_model.1} parent=5 // pred_check_branch
        %194 = sbr.rel (%p191) target = $region40
      $region39: #{_model.1} parent=5 // pred_region
        %s195 = ssub.s32 %s14, 1
        %p196 = scmp.lt.s32.totalorder %s19, 1
        %s197 = scalar_select %p196, %s19, 1
        %s198 = smul.addr %s197, 54
        %s199 = smul.addr %s198, 4
        %s200 = scalar_lea.vmem %s0, %s199
        %p201 = pneg %p40
        %p202 = pneg %p37
        %p203 = pneg %p61
        %p204 = pneg %p58
        %p205 = pneg %p82
        %p206 = pneg %p79
        %p207 = pneg %p103
        %p208 = pneg %p100
        %p209 = pneg %p124
        %p210 = pneg %p121
        %p211 = pneg %p150
        %p212 = pneg %p147
        %s213 = sand.u32 %s137, 1
        %s214 = scalar_lea.sflag [#allocation3], %s213
        %s215 = sand.u32 %s137, 1
        %s216 = scalar_lea.vmem [#allocation2], %s215
        %p217 = scmp.lt.s32.totalorder %s19, 1
        %s218 = scalar_select %p217, %s19, 1
        %s219 = smul.addr %s218, 54
        %s220 = smul.addr %s219, 4
        %s221 = scalar_lea.vmem %s0, %s220
        %v223 = vld [vmem:[%s221] sm:$0xf]
        %v224 = vld [vmem:[%s221 + $0x4] sm:$0xf]
        %v225 = vld [vmem:[%s221 + $0x8] sm:$0x1]
        %v226 = vld [vmem:[%s221 + $0xc] sm:$0xf]
        %v227 = vld [vmem:[%s221 + $0x10] sm:$0xf]
        %v228 = vld [vmem:[%s221 + $0x14] sm:$0x1]
        %v229 = vld [vmem:[%s221 + $0x18] sm:$0xf]
        %v230 = vld [vmem:[%s221 + $0x1c] sm:$0xf]
        %v231 = vld [vmem:[%s221 + $0x20] sm:$0x1]
        %v232 = vld [vmem:[%s221 + $0x24] sm:$0xf]
        %v233 = vld [vmem:[%s221 + $0x28] sm:$0xf]
        %v234 = vld [vmem:[%s221 + $0x2c] sm:$0x1]
        %v235 = vld [vmem:[%s221 + $0x30] sm:$0xf]
        %v236 = vld [vmem:[%s221 + $0x34] sm:$0xf]
        %v237 = vld [vmem:[%s221 + $0x38] sm:$0x1]
        %v238 = vld [vmem:[%s221 + $0x3c] sm:$0xf]
        %v239 = vld [vmem:[%s221 + $0x40] sm:$0xf]
        %v240 = vld [vmem:[%s221 + $0x44] sm:$0x1]
        %v241 = vld [vmem:[%s221 + $0x48] sm:$0xf]
        %v242 = vld [vmem:[%s221 + $0x4c] sm:$0xf]
        %v243 = vld [vmem:[%s221 + $0x50] sm:$0x1]
        %v244 = vld [vmem:[%s221 + $0x54] sm:$0xf]
        %v245 = vld [vmem:[%s221 + $0x58] sm:$0xf]
        %v246 = vld [vmem:[%s221 + $0x5c] sm:$0x1]
        %v247 = vld [vmem:[%s221 + $0x60] sm:$0xf]
        %v248 = vld [vmem:[%s221 + $0x64] sm:$0xf]
        %v249 = vld [vmem:[%s221 + $0x68] sm:$0x1]
        %v250 = vld [vmem:[%s221 + $0x6c] sm:$0xf]
        %v251 = vld [vmem:[%s221 + $0x70] sm:$0xf]
        %v252 = vld [vmem:[%s221 + $0x74] sm:$0x1]
        %v253 = vld [vmem:[%s221 + $0x78] sm:$0xf]
        %v254 = vld [vmem:[%s221 + $0x7c] sm:$0xf]
        %v255 = vld [vmem:[%s221 + $0x80] sm:$0x1]
        %v256 = vld [vmem:[%s221 + $0x84] sm:$0xf]
        %v257 = vld [vmem:[%s221 + $0x88] sm:$0xf]
        %v258 = vld [vmem:[%s221 + $0x8c] sm:$0x1]
        %v259 = vld [vmem:[%s221 + $0x90] sm:$0xf]
        %v260 = vld [vmem:[%s221 + $0x94] sm:$0xf]
        %v261 = vld [vmem:[%s221 + $0x98] sm:$0x1]
        %v262 = vld [vmem:[%s221 + $0x9c] sm:$0xf]
        %v263 = vld [vmem:[%s221 + $0xa0] sm:$0xf]
        %v264 = vld [vmem:[%s221 + $0xa4] sm:$0x1]
        %v265 = vld [vmem:[%s221 + $0xa8] sm:$0xf]
        %v266 = vld [vmem:[%s221 + $0xac] sm:$0xf]
        %v267 = vld [vmem:[%s221 + $0xb0] sm:$0x1]
        %v268 = vld [vmem:[%s221 + $0xb4] sm:$0xf]
        %v269 = vld [vmem:[%s221 + $0xb8] sm:$0xf]
        %v270 = vld [vmem:[%s221 + $0xbc] sm:$0x1]
        %v271 = vld [vmem:[%s221 + $0xc0] sm:$0xf]
        %v272 = vld [vmem:[%s221 + $0xc4] sm:$0xf]
        %v273 = vld [vmem:[%s221 + $0xc8] sm:$0x1]
        %v274 = vld [vmem:[%s221 + $0xcc] sm:$0xf]
        %v275 = vld [vmem:[%s221 + $0xd0] sm:$0xf]
        %v276 = vld [vmem:[%s221 + $0xd4] sm:$0x1]
        %v277 = vld [vmem:[%s1] sm:$0x3]
        %vm278 = vsmask.f32 3328
        %vm279 = vsmask.f32 7440
        %vm280 = vmor %vm278, %vm279
        %v282 = vshrl.u32 %v223, 16
        %v284 = vrot.slane %v282, 4
        %v285 = vshll.u32 %v223, 16
        %v287 = vrot.slane %v285, 5
        %v288 = vor.u32 %v284, %v287
        %v289 = vrot.slane %v288, 4
        %v291 = vshll.u32 %v224, 16
        %v293 = vrot.slane %v291, 5
        %v294 = vsel %vm280, %v289, %v293
        %v295 = vshrl.u32 %v224, 16
        %v297 = vrot.slane %v295, 4
        %v298 = vor.u32 %v297, %v293
        %v299 = vrot.slane %v298, 4
        %v301 = vshll.u32 %v225, 16
        %v303 = vrot.slane %v301, 5
        %v304 = vsel %vm280, %v299, %v303
        %v306 = vshrl.u32 %v226, 16
        %v308 = vrot.slane %v306, 4
        %v309 = vshll.u32 %v226, 16
        %v311 = vrot.slane %v309, 5
        %v312 = vor.u32 %v308, %v311
        %v313 = vrot.slane %v312, 4
        %v315 = vshll.u32 %v227, 16
        %v317 = vrot.slane %v315, 5
        %v318 = vsel %vm280, %v313, %v317
        %v319 = vshrl.u32 %v227, 16
        %v321 = vrot.slane %v319, 4
        %v322 = vor.u32 %v321, %v317
        %v323 = vrot.slane %v322, 4
        %v325 = vshll.u32 %v228, 16
        %v327 = vrot.slane %v325, 5
        %v328 = vsel %vm280, %v323, %v327
        %v330 = vshrl.u32 %v229, 16
        %v332 = vrot.slane %v330, 4
        %v333 = vshll.u32 %v229, 16
        %v335 = vrot.slane %v333, 5
        %v336 = vor.u32 %v332, %v335
        %v337 = vrot.slane %v336, 4
        %v339 = vshll.u32 %v230, 16
        %v341 = vrot.slane %v339, 5
        %v342 = vsel %vm280, %v337, %v341
        %v343 = vshrl.u32 %v230, 16
        %v345 = vrot.slane %v343, 4
        %v346 = vor.u32 %v345, %v341
        %v347 = vrot.slane %v346, 4
        %v349 = vshll.u32 %v231, 16
        %v351 = vrot.slane %v349, 5
        %v352 = vsel %vm280, %v347, %v351
        %v354 = vshrl.u32 %v232, 16
        %v356 = vrot.slane %v354, 4
        %v357 = vshll.u32 %v232, 16
        %v359 = vrot.slane %v357, 5
        %v360 = vor.u32 %v356, %v359
        %v361 = vrot.slane %v360, 4
        %v363 = vshll.u32 %v233, 16
        %v365 = vrot.slane %v363, 5
        %v366 = vsel %vm280, %v361, %v365
        %v367 = vshrl.u32 %v233, 16
        %v369 = vrot.slane %v367, 4
        %v370 = vor.u32 %v369, %v365
        %v371 = vrot.slane %v370, 4
        %v373 = vshll.u32 %v234, 16
        %v375 = vrot.slane %v373, 5
        %v376 = vsel %vm280, %v371, %v375
        %v378 = vshrl.u32 %v235, 16
        %v380 = vrot.slane %v378, 4
        %v381 = vshll.u32 %v235, 16
        %v383 = vrot.slane %v381, 5
        %v384 = vor.u32 %v380, %v383
        %v385 = vrot.slane %v384, 4
        %v387 = vshll.u32 %v236, 16
        %v389 = vrot.slane %v387, 5
        %v390 = vsel %vm280, %v385, %v389
        %v391 = vshrl.u32 %v236, 16
        %v393 = vrot.slane %v391, 4
        %v394 = vor.u32 %v393, %v389
        %v395 = vrot.slane %v394, 4
        %v397 = vshll.u32 %v237, 16
        %v399 = vrot.slane %v397, 5
        %v400 = vsel %vm280, %v395, %v399
        %v402 = vshrl.u32 %v238, 16
        %v404 = vrot.slane %v402, 4
        %v405 = vshll.u32 %v238, 16
        %v407 = vrot.slane %v405, 5
        %v408 = vor.u32 %v404, %v407
        %v409 = vrot.slane %v408, 4
        %v411 = vshll.u32 %v239, 16
        %v413 = vrot.slane %v411, 5
        %v414 = vsel %vm280, %v409, %v413
        %v415 = vshrl.u32 %v239, 16
        %v417 = vrot.slane %v415, 4
        %v418 = vor.u32 %v417, %v413
        %v419 = vrot.slane %v418, 4
        %v421 = vshll.u32 %v240, 16
        %v423 = vrot.slane %v421, 5
        %v424 = vsel %vm280, %v419, %v423
        %v426 = vshrl.u32 %v241, 16
        %v428 = vrot.slane %v426, 4
        %v429 = vshll.u32 %v241, 16
        %v431 = vrot.slane %v429, 5
        %v432 = vor.u32 %v428, %v431
        %v433 = vrot.slane %v432, 4
        %v435 = vshll.u32 %v242, 16
        %v437 = vrot.slane %v435, 5
        %v438 = vsel %vm280, %v433, %v437
        %v439 = vshrl.u32 %v242, 16
        %v441 = vrot.slane %v439, 4
        %v442 = vor.u32 %v441, %v437
        %v443 = vrot.slane %v442, 4
        %v445 = vshll.u32 %v243, 16
        %v447 = vrot.slane %v445, 5
        %v448 = vsel %vm280, %v443, %v447
        %v450 = vshrl.u32 %v244, 16
        %v452 = vrot.slane %v450, 4
        %v453 = vshll.u32 %v244, 16
        %v455 = vrot.slane %v453, 5
        %v456 = vor.u32 %v452, %v455
        %v457 = vrot.slane %v456, 4
        %v459 = vshll.u32 %v245, 16
        %v461 = vrot.slane %v459, 5
        %v462 = vsel %vm280, %v457, %v461
        %v463 = vshrl.u32 %v245, 16
        %v465 = vrot.slane %v463, 4
        %v466 = vor.u32 %v465, %v461
        %v467 = vrot.slane %v466, 4
        %v469 = vshll.u32 %v246, 16
        %v471 = vrot.slane %v469, 5
        %v472 = vsel %vm280, %v467, %v471
        %v474 = vshrl.u32 %v247, 16
        %v476 = vrot.slane %v474, 4
        %v477 = vshll.u32 %v247, 16
        %v479 = vrot.slane %v477, 5
        %v480 = vor.u32 %v476, %v479
        %v481 = vrot.slane %v480, 4
        %v483 = vshll.u32 %v248, 16
        %v485 = vrot.slane %v483, 5
        %v486 = vsel %vm280, %v481, %v485
        %v487 = vshrl.u32 %v248, 16
        %v489 = vrot.slane %v487, 4
        %v490 = vor.u32 %v489, %v485
        %v491 = vrot.slane %v490, 4
        %v493 = vshll.u32 %v249, 16
        %v495 = vrot.slane %v493, 5
        %v496 = vsel %vm280, %v491, %v495
        %v498 = vshrl.u32 %v250, 16
        %v500 = vrot.slane %v498, 4
        %v501 = vshll.u32 %v250, 16
        %v503 = vrot.slane %v501, 5
        %v504 = vor.u32 %v500, %v503
        %v505 = vrot.slane %v504, 4
        %v507 = vshll.u32 %v251, 16
        %v509 = vrot.slane %v507, 5
        %v510 = vsel %vm280, %v505, %v509
        %v511 = vshrl.u32 %v251, 16
        %v513 = vrot.slane %v511, 4
        %v514 = vor.u32 %v513, %v509
        %v515 = vrot.slane %v514, 4
        %v517 = vshll.u32 %v252, 16
        %v519 = vrot.slane %v517, 5
        %v520 = vsel %vm280, %v515, %v519
        %v522 = vshrl.u32 %v253, 16
        %v524 = vrot.slane %v522, 4
        %v525 = vshll.u32 %v253, 16
        %v527 = vrot.slane %v525, 5
        %v528 = vor.u32 %v524, %v527
        %v529 = vrot.slane %v528, 4
        %v531 = vshll.u32 %v254, 16
        %v533 = vrot.slane %v531, 5
        %v534 = vsel %vm280, %v529, %v533
        %v535 = vshrl.u32 %v254, 16
        %v537 = vrot.slane %v535, 4
        %v538 = vor.u32 %v537, %v533
        %v539 = vrot.slane %v538, 4
        %v541 = vshll.u32 %v255, 16
        %v543 = vrot.slane %v541, 5
        %v544 = vsel %vm280, %v539, %v543
        %v546 = vshrl.u32 %v256, 16
        %v548 = vrot.slane %v546, 4
        %v549 = vshll.u32 %v256, 16
        %v551 = vrot.slane %v549, 5
        %v552 = vor.u32 %v548, %v551
        %v553 = vrot.slane %v552, 4
        %v555 = vshll.u32 %v257, 16
        %v557 = vrot.slane %v555, 5
        %v558 = vsel %vm280, %v553, %v557
        %v559 = vshrl.u32 %v257, 16
        %v561 = vrot.slane %v559, 4
        %v562 = vor.u32 %v561, %v557
        %v563 = vrot.slane %v562, 4
        %v565 = vshll.u32 %v258, 16
        %v567 = vrot.slane %v565, 5
        %v568 = vsel %vm280, %v563, %v567
        %v570 = vshrl.u32 %v259, 16
        %v572 = vrot.slane %v570, 4
        %v573 = vshll.u32 %v259, 16
        %v575 = vrot.slane %v573, 5
        %v576 = vor.u32 %v572, %v575
        %v577 = vrot.slane %v576, 4
        %v579 = vshll.u32 %v260, 16
        %v581 = vrot.slane %v579, 5
        %v582 = vsel %vm280, %v577, %v581
        %v583 = vshrl.u32 %v260, 16
        %v585 = vrot.slane %v583, 4
        %v586 = vor.u32 %v585, %v581
        %v587 = vrot.slane %v586, 4
        %v589 = vshll.u32 %v261, 16
        %v591 = vrot.slane %v589, 5
        %v592 = vsel %vm280, %v587, %v591
        %v594 = vshrl.u32 %v262, 16
        %v596 = vrot.slane %v594, 4
        %v597 = vshll.u32 %v262, 16
        %v599 = vrot.slane %v597, 5
        %v600 = vor.u32 %v596, %v599
        %v601 = vrot.slane %v600, 4
        %v603 = vshll.u32 %v263, 16
        %v605 = vrot.slane %v603, 5
        %v606 = vsel %vm280, %v601, %v605
        %v607 = vshrl.u32 %v263, 16
        %v609 = vrot.slane %v607, 4
        %v610 = vor.u32 %v609, %v605
        %v611 = vrot.slane %v610, 4
        %v613 = vshll.u32 %v264, 16
        %v615 = vrot.slane %v613, 5
        %v616 = vsel %vm280, %v611, %v615
        %v618 = vshrl.u32 %v265, 16
        %v620 = vrot.slane %v618, 4
        %v621 = vshll.u32 %v265, 16
        %v623 = vrot.slane %v621, 5
        %v624 = vor.u32 %v620, %v623
        %v625 = vrot.slane %v624, 4
        %v627 = vshll.u32 %v266, 16
        %v629 = vrot.slane %v627, 5
        %v630 = vsel %vm280, %v625, %v629
        %v631 = vshrl.u32 %v266, 16
        %v633 = vrot.slane %v631, 4
        %v634 = vor.u32 %v633, %v629
        %v635 = vrot.slane %v634, 4
        %v637 = vshll.u32 %v267, 16
        %v639 = vrot.slane %v637, 5
        %v640 = vsel %vm280, %v635, %v639
        %v642 = vshrl.u32 %v268, 16
        %v644 = vrot.slane %v642, 4
        %v645 = vshll.u32 %v268, 16
        %v647 = vrot.slane %v645, 5
        %v648 = vor.u32 %v644, %v647
        %v649 = vrot.slane %v648, 4
        %v651 = vshll.u32 %v269, 16
        %v653 = vrot.slane %v651, 5
        %v654 = vsel %vm280, %v649, %v653
        %v655 = vshrl.u32 %v269, 16
        %v657 = vrot.slane %v655, 4
        %v658 = vor.u32 %v657, %v653
        %v659 = vrot.slane %v658, 4
        %v661 = vshll.u32 %v270, 16
        %v663 = vrot.slane %v661, 5
        %v664 = vsel %vm280, %v659, %v663
        %v665 = vld [vmem:[%s1] sm:$0xc]
        %v666 = vunpack.c.l.b16 %v294
        %v667 = vunpack.c.l.b16 %v304
        %v668 = vunpack.c.l.b16 %v318
        %v669 = vunpack.c.l.b16 %v328
        %v670 = vunpack.c.l.b16 %v342
        %v671 = vunpack.c.l.b16 %v352
        %v672 = vunpack.c.l.b16 %v366
        %v673 = vunpack.c.l.b16 %v376
        %v674 = vunpack.c.l.b16 %v390
        %v675 = vunpack.c.l.b16 %v400
        %v676 = vunpack.c.l.b16 %v414
        %v677 = vunpack.c.l.b16 %v424
        %v678 = vunpack.c.l.b16 %v438
        %v679 = vunpack.c.l.b16 %v448
        %v680 = vunpack.c.l.b16 %v462
        %v681 = vunpack.c.l.b16 %v472
        %v682 = vunpack.c.l.b16 %v486
        %v683 = vunpack.c.l.b16 %v496
        %v684 = vunpack.c.l.b16 %v510
        %v685 = vunpack.c.l.b16 %v520
        %v686 = vunpack.c.l.b16 %v534
        %v687 = vunpack.c.l.b16 %v544
        %v688 = vunpack.c.l.b16 %v558
        %v689 = vunpack.c.l.b16 %v568
        %v690 = vunpack.c.l.b16 %v582
        %v691 = vunpack.c.l.b16 %v592
        %v692 = vunpack.c.l.b16 %v606
        %v693 = vunpack.c.l.b16 %v616
        %v694 = vunpack.c.l.b16 %v630
        %v695 = vunpack.c.l.b16 %v640
        %v696 = vunpack.c.l.b16 %v654
        %v697 = vunpack.c.l.b16 %v664
        %v698 = vpack.c.b16 %v667, %v666
        %v699 = vpack.c.b16 %v669, %v668
        %v700 = vpack.c.b16 %v671, %v670
        %v701 = vpack.c.b16 %v673, %v672
        %v702 = vpack.c.b16 %v675, %v674
        %v703 = vpack.c.b16 %v677, %v676
        %v704 = vpack.c.b16 %v679, %v678
        %v705 = vpack.c.b16 %v681, %v680
        %v706 = vpack.c.b16 %v683, %v682
        %v707 = vpack.c.b16 %v685, %v684
        %v708 = vpack.c.b16 %v687, %v686
        %v709 = vpack.c.b16 %v689, %v688
        %v710 = vpack.c.b16 %v691, %v690
        %v711 = vpack.c.b16 %v693, %v692
        %v712 = vpack.c.b16 %v695, %v694
        %v713 = vpack.c.b16 %v697, %v696
        %v715 = vunpack.c.l.b16 %v665
        %v716 = vpack.c.b16 %v715, %v715
        %v717 = vrot.slane %v716, 2
        %vm718 = vcmask 31744
        %v720 = vsel %vm718, %v698, 0
        %v723 = vsel %vm718, %v699, 0
        %v726 = vsel %vm718, %v700, 0
        %v729 = vsel %vm718, %v701, 0
        %v732 = vsel %vm718, %v702, 0
        %v735 = vsel %vm718, %v703, 0
        %v738 = vsel %vm718, %v704, 0
        %v741 = vsel %vm718, %v705, 0
        %v744 = vsel %vm718, %v706, 0
        %v747 = vsel %vm718, %v707, 0
        %v750 = vsel %vm718, %v708, 0
        %v753 = vsel %vm718, %v709, 0
        %v756 = vsel %vm718, %v710, 0
        %v759 = vsel %vm718, %v711, 0
        %v762 = vsel %vm718, %v712, 0
        %v765 = vsel %vm718, %v713, 0
        %vm767 = vcmask 1041408
        %v769 = vsel %vm767, %v717, 0
        %771 = vmatprep.subr.bf16.mxu0 0
        %772 = vmatpush1.bf16.msra.mxu0 0
        %773 = vmatprep.subr.bf16.mxu0 0
        %774 = vmatpush1.bf16.msra.mxu0 0
        %775 = vmatprep.subr.bf16.mxu0 0
        %776 = vmatpush1.bf16.msra.mxu0 0
        %777 = vmatprep.subr.bf16.mxu0 0
        %778 = vmatpush1.bf16.msra.mxu0 0
        %779 = vmatprep.subr.bf16.mxu0 0
        %780 = vmatpush1.bf16.msra.mxu0 0
        %781 = vmatprep.subr.bf16.mxu0 0
        %782 = vmatpush1.bf16.msra.mxu0 0
        %783 = vmatprep.subr.bf16.mxu0 0
        %784 = vmatpush1.bf16.msra.mxu0 0
        %785 = vmatprep.subr.bf16.mxu0 0
        %786 = vmatpush1.bf16.msra.mxu0 %v769
        %787 = vmatprep.subr.bf16.mxu0 0
        %788 = vmatpush2.bf16.msra.mxu0 0
        %789 = vmatprep.subr.bf16.mxu0 0
        %790 = vmatpush2.bf16.msra.mxu0 0
        %791 = vmatprep.subr.bf16.mxu0 0
        %792 = vmatpush2.bf16.msra.mxu0 0
        %793 = vmatprep.subr.bf16.mxu0 0
        %794 = vmatpush2.bf16.msra.mxu0 0
        %795 = vmatprep.subr.bf16.mxu0 0
        %796 = vmatpush2.bf16.msra.mxu0 0
        %797 = vmatprep.subr.bf16.mxu0 0
        %798 = vmatpush2.bf16.msra.mxu0 0
        %799 = vmatprep.subr.bf16.mxu0 0
        %800 = vmatpush2.bf16.msra.mxu0 0
        %801 = vmatprep.subr.bf16.mxu0 0
        %802 = vmatpush2.bf16.msra.mxu0 0
        %803 = vmatprep.mubr.bf16.mxu0 0
        %804 = vmatmul.mubr.bf16.gmra.mxu0 %v720
        %v805 = vpop.f32.mrf.mxu0
        %v806 = vadd.f32 0.0, %v805
        %v807 = vpop.f32.mrf.mxu0
        %v808 = vpop.f32.mrf.mxu0
        %v809 = vadd.f32 0.0, %v808
        %v810 = vpop.f32.mrf.mxu0
        %811 = vmatprep.mubr.bf16.mxu0 0
        %812 = vmatmul.mubr.bf16.gmra.mxu0 %v723
        %v813 = vpop.f32.mrf.mxu0
        %v814 = vadd.f32 0.0, %v813
        %v815 = vpop.f32.mrf.mxu0
        %v816 = vpop.f32.mrf.mxu0
        %v817 = vadd.f32 0.0, %v816
        %v818 = vpop.f32.mrf.mxu0
        %819 = vmatprep.mubr.bf16.mxu0 0
        %820 = vmatmul.mubr.bf16.gmra.mxu0 %v726
        %v821 = vpop.f32.mrf.mxu0
        %v822 = vadd.f32 0.0, %v821
        %v823 = vpop.f32.mrf.mxu0
        %v824 = vpop.f32.mrf.mxu0
        %v825 = vadd.f32 0.0, %v824
        %v826 = vpop.f32.mrf.mxu0
        %827 = vmatprep.mubr.bf16.mxu0 0
        %828 = vmatmul.mubr.bf16.gmra.mxu0 %v729
        %v829 = vpop.f32.mrf.mxu0
        %v830 = vadd.f32 0.0, %v829
        %v831 = vpop.f32.mrf.mxu0
        %v832 = vpop.f32.mrf.mxu0
        %v833 = vadd.f32 0.0, %v832
        %v834 = vpop.f32.mrf.mxu0
        %835 = vmatprep.mubr.bf16.mxu0 0
        %836 = vmatmul.mubr.bf16.gmra.mxu0 %v732
        %v837 = vpop.f32.mrf.mxu0
        %v838 = vadd.f32 0.0, %v837
        %v839 = vpop.f32.mrf.mxu0
        %v840 = vpop.f32.mrf.mxu0
        %v841 = vadd.f32 0.0, %v840
        %v842 = vpop.f32.mrf.mxu0
        %843 = vmatprep.mubr.bf16.mxu0 0
        %844 = vmatmul.mubr.bf16.gmra.mxu0 %v735
        %v845 = vpop.f32.mrf.mxu0
        %v846 = vadd.f32 0.0, %v845
        %v847 = vpop.f32.mrf.mxu0
        %v848 = vpop.f32.mrf.mxu0
        %v849 = vadd.f32 0.0, %v848
        %v850 = vpop.f32.mrf.mxu0
        %851 = vmatprep.mubr.bf16.mxu0 0
        %852 = vmatmul.mubr.bf16.gmra.mxu0 %v738
        %v853 = vpop.f32.mrf.mxu0
        %v854 = vadd.f32 0.0, %v853
        %v855 = vpop.f32.mrf.mxu0
        %v856 = vpop.f32.mrf.mxu0
        %v857 = vadd.f32 0.0, %v856
        %v858 = vpop.f32.mrf.mxu0
        %859 = vmatprep.mubr.bf16.mxu0 0
        %860 = vmatmul.mubr.bf16.gmra.mxu0 %v741
        %v861 = vpop.f32.mrf.mxu0
        %v862 = vadd.f32 0.0, %v861
        %v863 = vpop.f32.mrf.mxu0
        %v864 = vpop.f32.mrf.mxu0
        %v865 = vadd.f32 0.0, %v864
        %v866 = vpop.f32.mrf.mxu0
        %867 = vmatprep.mubr.bf16.mxu0 0
        %868 = vmatmul.mubr.bf16.gmra.mxu0 %v744
        %v869 = vpop.f32.mrf.mxu0
        %v870 = vadd.f32 0.0, %v869
        %v871 = vpop.f32.mrf.mxu0
        %v872 = vpop.f32.mrf.mxu0
        %v873 = vadd.f32 0.0, %v872
        %v874 = vpop.f32.mrf.mxu0
        %875 = vmatprep.mubr.bf16.mxu0 0
        %876 = vmatmul.mubr.bf16.gmra.mxu0 %v747
        %v877 = vpop.f32.mrf.mxu0
        %v878 = vadd.f32 0.0, %v877
        %v879 = vpop.f32.mrf.mxu0
        %v880 = vpop.f32.mrf.mxu0
        %v881 = vadd.f32 0.0, %v880
        %v882 = vpop.f32.mrf.mxu0
        %883 = vmatprep.mubr.bf16.mxu0 0
        %884 = vmatmul.mubr.bf16.gmra.mxu0 %v750
        %v885 = vpop.f32.mrf.mxu0
        %v886 = vadd.f32 0.0, %v885
        %v887 = vpop.f32.mrf.mxu0
        %v888 = vpop.f32.mrf.mxu0
        %v889 = vadd.f32 0.0, %v888
        %v890 = vpop.f32.mrf.mxu0
        %891 = vmatprep.mubr.bf16.mxu0 0
        %892 = vmatmul.mubr.bf16.gmra.mxu0 %v753
        %v893 = vpop.f32.mrf.mxu0
        %v894 = vadd.f32 0.0, %v893
        %v895 = vpop.f32.mrf.mxu0
        %v896 = vpop.f32.mrf.mxu0
        %v897 = vadd.f32 0.0, %v896
        %v898 = vpop.f32.mrf.mxu0
        %899 = vmatprep.mubr.bf16.mxu0 0
        %900 = vmatmul.mubr.bf16.gmra.mxu0 %v756
        %v901 = vpop.f32.mrf.mxu0
        %v902 = vadd.f32 0.0, %v901
        %v903 = vpop.f32.mrf.mxu0
        %v904 = vpop.f32.mrf.mxu0
        %v905 = vadd.f32 0.0, %v904
        %v906 = vpop.f32.mrf.mxu0
        %907 = vmatprep.mubr.bf16.mxu0 0
        %908 = vmatmul.mubr.bf16.gmra.mxu0 %v759
        %v909 = vpop.f32.mrf.mxu0
        %v910 = vadd.f32 0.0, %v909
        %v911 = vpop.f32.mrf.mxu0
        %v912 = vpop.f32.mrf.mxu0
        %v913 = vadd.f32 0.0, %v912
        %v914 = vpop.f32.mrf.mxu0
        %915 = vmatprep.mubr.bf16.mxu0 0
        %916 = vmatmul.mubr.bf16.gmra.mxu0 %v762
        %v917 = vpop.f32.mrf.mxu0
        %v918 = vadd.f32 0.0, %v917
        %v919 = vpop.f32.mrf.mxu0
        %v920 = vpop.f32.mrf.mxu0
        %v921 = vadd.f32 0.0, %v920
        %v922 = vpop.f32.mrf.mxu0
        %923 = vmatprep.mubr.bf16.mxu0 0
        %924 = vmatmul.mubr.bf16.gmra.mxu0 %v765
        %v925 = vpop.f32.mrf.mxu0
        %v926 = vadd.f32 0.0, %v925
        %v927 = vpop.f32.mrf.mxu0
        %v928 = vpop.f32.mrf.mxu0
        %v929 = vadd.f32 0.0, %v928
        %v930 = vpop.f32.mrf.mxu0
        %931 = vdwg.mxu0
        %v964 = vunpack.c.l.b16 %v223
        %v965 = vunpack.c.l.b16 %v224
        %v966 = vunpack.c.l.b16 %v226
        %v967 = vunpack.c.l.b16 %v227
        %v968 = vunpack.c.l.b16 %v229
        %v969 = vunpack.c.l.b16 %v230
        %v970 = vunpack.c.l.b16 %v232
        %v971 = vunpack.c.l.b16 %v233
        %v972 = vunpack.c.l.b16 %v235
        %v973 = vunpack.c.l.b16 %v236
        %v974 = vunpack.c.l.b16 %v238
        %v975 = vunpack.c.l.b16 %v239
        %v976 = vunpack.c.l.b16 %v241
        %v977 = vunpack.c.l.b16 %v242
        %v978 = vunpack.c.l.b16 %v244
        %v979 = vunpack.c.l.b16 %v245
        %v980 = vunpack.c.l.b16 %v247
        %v981 = vunpack.c.l.b16 %v248
        %v982 = vunpack.c.l.b16 %v250
        %v983 = vunpack.c.l.b16 %v251
        %v984 = vunpack.c.l.b16 %v253
        %v985 = vunpack.c.l.b16 %v254
        %v986 = vunpack.c.l.b16 %v256
        %v987 = vunpack.c.l.b16 %v257
        %v988 = vunpack.c.l.b16 %v259
        %v989 = vunpack.c.l.b16 %v260
        %v990 = vunpack.c.l.b16 %v262
        %v991 = vunpack.c.l.b16 %v263
        %v992 = vunpack.c.l.b16 %v265
        %v993 = vunpack.c.l.b16 %v266
        %v994 = vunpack.c.l.b16 %v268
        %v995 = vunpack.c.l.b16 %v269
        %v996 = vpack.c.b16 %v965, %v964
        %v997 = vpack.c.b16 %v967, %v966
        %v998 = vpack.c.b16 %v969, %v968
        %v999 = vpack.c.b16 %v971, %v970
        %v1000 = vpack.c.b16 %v973, %v972
        %v1001 = vpack.c.b16 %v975, %v974
        %v1002 = vpack.c.b16 %v977, %v976
        %v1003 = vpack.c.b16 %v979, %v978
        %v1004 = vpack.c.b16 %v981, %v980
        %v1005 = vpack.c.b16 %v983, %v982
        %v1006 = vpack.c.b16 %v985, %v984
        %v1007 = vpack.c.b16 %v987, %v986
        %v1008 = vpack.c.b16 %v989, %v988
        %v1009 = vpack.c.b16 %v991, %v990
        %v1010 = vpack.c.b16 %v993, %v992
        %v1011 = vpack.c.b16 %v995, %v994
        %v1013 = vsel %vm718, %v996, 0
        %v1016 = vsel %vm718, %v997, 0
        %v1019 = vsel %vm718, %v998, 0
        %v1022 = vsel %vm718, %v999, 0
        %v1025 = vsel %vm718, %v1000, 0
        %v1028 = vsel %vm718, %v1001, 0
        %v1031 = vsel %vm718, %v1002, 0
        %v1034 = vsel %vm718, %v1003, 0
        %v1037 = vsel %vm718, %v1004, 0
        %v1040 = vsel %vm718, %v1005, 0
        %v1043 = vsel %vm718, %v1006, 0
        %v1046 = vsel %vm718, %v1007, 0
        %v1049 = vsel %vm718, %v1008, 0
        %v1052 = vsel %vm718, %v1009, 0
        %v1055 = vsel %vm718, %v1010, 0
        %v1058 = vsel %vm718, %v1011, 0
        %v1061 = vsel %vm767, %v277, 0
        %1063 = vmatprep.subr.bf16.mxu0 0
        %1064 = vmatpush1.bf16.msra.mxu0 0
        %1065 = vmatprep.subr.bf16.mxu0 0
        %1066 = vmatpush1.bf16.msra.mxu0 0
        %1067 = vmatprep.subr.bf16.mxu0 0
        %1068 = vmatpush1.bf16.msra.mxu0 0
        %1069 = vmatprep.subr.bf16.mxu0 0
        %1070 = vmatpush1.bf16.msra.mxu0 0
        %1071 = vmatprep.subr.bf16.mxu0 0
        %1072 = vmatpush1.bf16.msra.mxu0 0
        %1073 = vmatprep.subr.bf16.mxu0 0
        %1074 = vmatpush1.bf16.msra.mxu0 0
        %1075 = vmatprep.subr.bf16.mxu0 0
        %1076 = vmatpush1.bf16.msra.mxu0 0
        %1077 = vmatprep.subr.bf16.mxu0 0
        %1078 = vmatpush1.bf16.msra.mxu0 %v1061
        %1079 = vmatprep.subr.bf16.mxu0 0
        %1080 = vmatpush2.bf16.msra.mxu0 0
        %1081 = vmatprep.subr.bf16.mxu0 0
        %1082 = vmatpush2.bf16.msra.mxu0 0
        %1083 = vmatprep.subr.bf16.mxu0 0
        %1084 = vmatpush2.bf16.msra.mxu0 0
        %1085 = vmatprep.subr.bf16.mxu0 0
        %1086 = vmatpush2.bf16.msra.mxu0 0
        %1087 = vmatprep.subr.bf16.mxu0 0
        %1088 = vmatpush2.bf16.msra.mxu0 0
        %1089 = vmatprep.subr.bf16.mxu0 0
        %1090 = vmatpush2.bf16.msra.mxu0 0
        %1091 = vmatprep.subr.bf16.mxu0 0
        %1092 = vmatpush2.bf16.msra.mxu0 0
        %1093 = vmatprep.subr.bf16.mxu0 0
        %1094 = vmatpush2.bf16.msra.mxu0 0
        %1095 = vmatprep.mubr.bf16.mxu0 0
        %1096 = vmatmul.mubr.bf16.gmra.mxu0 %v1013
        %v1097 = vpop.f32.mrf.mxu0
        %v1098 = vadd.f32 %v806, %v1097
        %v1099 = vpop.f32.mrf.mxu0
        %v1100 = vpop.f32.mrf.mxu0
        %v1101 = vadd.f32 %v809, %v1100
        %v1102 = vpop.f32.mrf.mxu0
        %1103 = vmatprep.mubr.bf16.mxu0 0
        %1104 = vmatmul.mubr.bf16.gmra.mxu0 %v1016
        %v1105 = vpop.f32.mrf.mxu0
        %v1106 = vadd.f32 %v814, %v1105
        %v1107 = vpop.f32.mrf.mxu0
        %v1108 = vpop.f32.mrf.mxu0
        %v1109 = vadd.f32 %v817, %v1108
        %v1110 = vpop.f32.mrf.mxu0
        %1111 = vmatprep.mubr.bf16.mxu0 0
        %1112 = vmatmul.mubr.bf16.gmra.mxu0 %v1019
        %v1113 = vpop.f32.mrf.mxu0
        %v1114 = vadd.f32 %v822, %v1113
        %v1115 = vpop.f32.mrf.mxu0
        %v1116 = vpop.f32.mrf.mxu0
        %v1117 = vadd.f32 %v825, %v1116
        %v1118 = vpop.f32.mrf.mxu0
        %1119 = vmatprep.mubr.bf16.mxu0 0
        %1120 = vmatmul.mubr.bf16.gmra.mxu0 %v1022
        %v1121 = vpop.f32.mrf.mxu0
        %v1122 = vadd.f32 %v830, %v1121
        %v1123 = vpop.f32.mrf.mxu0
        %v1124 = vpop.f32.mrf.mxu0
        %v1125 = vadd.f32 %v833, %v1124
        %v1126 = vpop.f32.mrf.mxu0
        %1127 = vmatprep.mubr.bf16.mxu0 0
        %1128 = vmatmul.mubr.bf16.gmra.mxu0 %v1025
        %v1129 = vpop.f32.mrf.mxu0
        %v1130 = vadd.f32 %v838, %v1129
        %v1131 = vpop.f32.mrf.mxu0
        %v1132 = vpop.f32.mrf.mxu0
        %v1133 = vadd.f32 %v841, %v1132
        %v1134 = vpop.f32.mrf.mxu0
        %1135 = vmatprep.mubr.bf16.mxu0 0
        %1136 = vmatmul.mubr.bf16.gmra.mxu0 %v1028
        %v1137 = vpop.f32.mrf.mxu0
        %v1138 = vadd.f32 %v846, %v1137
        %v1139 = vpop.f32.mrf.mxu0
        %v1140 = vpop.f32.mrf.mxu0
        %v1141 = vadd.f32 %v849, %v1140
        %v1142 = vpop.f32.mrf.mxu0
        %1143 = vmatprep.mubr.bf16.mxu0 0
        %1144 = vmatmul.mubr.bf16.gmra.mxu0 %v1031
        %v1145 = vpop.f32.mrf.mxu0
        %v1146 = vadd.f32 %v854, %v1145
        %v1147 = vpop.f32.mrf.mxu0
        %v1148 = vpop.f32.mrf.mxu0
        %v1149 = vadd.f32 %v857, %v1148
        %v1150 = vpop.f32.mrf.mxu0
        %1151 = vmatprep.mubr.bf16.mxu0 0
        %1152 = vmatmul.mubr.bf16.gmra.mxu0 %v1034
        %v1153 = vpop.f32.mrf.mxu0
        %v1154 = vadd.f32 %v862, %v1153
        %v1155 = vpop.f32.mrf.mxu0
        %v1156 = vpop.f32.mrf.mxu0
        %v1157 = vadd.f32 %v865, %v1156
        %v1158 = vpop.f32.mrf.mxu0
        %1159 = vmatprep.mubr.bf16.mxu0 0
        %1160 = vmatmul.mubr.bf16.gmra.mxu0 %v1037
        %v1161 = vpop.f32.mrf.mxu0
        %v1162 = vadd.f32 %v870, %v1161
        %v1163 = vpop.f32.mrf.mxu0
        %v1164 = vpop.f32.mrf.mxu0
        %v1165 = vadd.f32 %v873, %v1164
        %v1166 = vpop.f32.mrf.mxu0
        %1167 = vmatprep.mubr.bf16.mxu0 0
        %1168 = vmatmul.mubr.bf16.gmra.mxu0 %v1040
        %v1169 = vpop.f32.mrf.mxu0
        %v1170 = vadd.f32 %v878, %v1169
        %v1171 = vpop.f32.mrf.mxu0
        %v1172 = vpop.f32.mrf.mxu0
        %v1173 = vadd.f32 %v881, %v1172
        %v1174 = vpop.f32.mrf.mxu0
        %1175 = vmatprep.mubr.bf16.mxu0 0
        %1176 = vmatmul.mubr.bf16.gmra.mxu0 %v1043
        %v1177 = vpop.f32.mrf.mxu0
        %v1178 = vadd.f32 %v886, %v1177
        %v1179 = vpop.f32.mrf.mxu0
        %v1180 = vpop.f32.mrf.mxu0
        %v1181 = vadd.f32 %v889, %v1180
        %v1182 = vpop.f32.mrf.mxu0
        %1183 = vmatprep.mubr.bf16.mxu0 0
        %1184 = vmatmul.mubr.bf16.gmra.mxu0 %v1046
        %v1185 = vpop.f32.mrf.mxu0
        %v1186 = vadd.f32 %v894, %v1185
        %v1187 = vpop.f32.mrf.mxu0
        %v1188 = vpop.f32.mrf.mxu0
        %v1189 = vadd.f32 %v897, %v1188
        %v1190 = vpop.f32.mrf.mxu0
        %1191 = vmatprep.mubr.bf16.mxu0 0
        %1192 = vmatmul.mubr.bf16.gmra.mxu0 %v1049
        %v1193 = vpop.f32.mrf.mxu0
        %v1194 = vadd.f32 %v902, %v1193
        %v1195 = vpop.f32.mrf.mxu0
        %v1196 = vpop.f32.mrf.mxu0
        %v1197 = vadd.f32 %v905, %v1196
        %v1198 = vpop.f32.mrf.mxu0
        %1199 = vmatprep.mubr.bf16.mxu0 0
        %1200 = vmatmul.mubr.bf16.gmra.mxu0 %v1052
        %v1201 = vpop.f32.mrf.mxu0
        %v1202 = vadd.f32 %v910, %v1201
        %v1203 = vpop.f32.mrf.mxu0
        %v1204 = vpop.f32.mrf.mxu0
        %v1205 = vadd.f32 %v913, %v1204
        %v1206 = vpop.f32.mrf.mxu0
        %1207 = vmatprep.mubr.bf16.mxu0 0
        %1208 = vmatmul.mubr.bf16.gmra.mxu0 %v1055
        %v1209 = vpop.f32.mrf.mxu0
        %v1210 = vadd.f32 %v918, %v1209
        %v1211 = vpop.f32.mrf.mxu0
        %v1212 = vpop.f32.mrf.mxu0
        %v1213 = vadd.f32 %v921, %v1212
        %v1214 = vpop.f32.mrf.mxu0
        %1215 = vmatprep.mubr.bf16.mxu0 0
        %1216 = vmatmul.mubr.bf16.gmra.mxu0 %v1058
        %v1217 = vpop.f32.mrf.mxu0
        %v1218 = vadd.f32 %v926, %v1217
        %v1219 = vpop.f32.mrf.mxu0
        %v1220 = vpop.f32.mrf.mxu0
        %v1221 = vadd.f32 %v929, %v1220
        %v1222 = vpop.f32.mrf.mxu0
        %1223 = vdwg.mxu0
        %vm1240 = vcmask 1042432
        %vm1241 = vcmask 1046532
        %vm1242 = vmor %vm1240, %vm1241
        %v1243 = vrot.slane %v223, 5
        %v1244 = vrot.slane %v1243, 4
        %v1245 = vrot.slane %v224, 5
        %v1246 = vsel %vm1242, %v1244, %v1245
        %v1247 = vrot.slane %v1245, 4
        %v1248 = vrot.slane %v225, 5
        %v1249 = vsel %vm1242, %v1247, %v1248
        %v1250 = vrot.slane %v226, 5
        %v1251 = vrot.slane %v1250, 4
        %v1252 = vrot.slane %v227, 5
        %v1253 = vsel %vm1242, %v1251, %v1252
        %v1254 = vrot.slane %v1252, 4
        %v1255 = vrot.slane %v228, 5
        %v1256 = vsel %vm1242, %v1254, %v1255
        %v1257 = vrot.slane %v229, 5
        %v1258 = vrot.slane %v1257, 4
        %v1259 = vrot.slane %v230, 5
        %v1260 = vsel %vm1242, %v1258, %v1259
        %v1261 = vrot.slane %v1259, 4
        %v1262 = vrot.slane %v231, 5
        %v1263 = vsel %vm1242, %v1261, %v1262
        %v1264 = vrot.slane %v232, 5
        %v1265 = vrot.slane %v1264, 4
        %v1266 = vrot.slane %v233, 5
        %v1267 = vsel %vm1242, %v1265, %v1266
        %v1268 = vrot.slane %v1266, 4
        %v1269 = vrot.slane %v234, 5
        %v1270 = vsel %vm1242, %v1268, %v1269
        %v1271 = vrot.slane %v235, 5
        %v1272 = vrot.slane %v1271, 4
        %v1273 = vrot.slane %v236, 5
        %v1274 = vsel %vm1242, %v1272, %v1273
        %v1275 = vrot.slane %v1273, 4
        %v1276 = vrot.slane %v237, 5
        %v1277 = vsel %vm1242, %v1275, %v1276
        %v1278 = vrot.slane %v238, 5
        %v1279 = vrot.slane %v1278, 4
        %v1280 = vrot.slane %v239, 5
        %v1281 = vsel %vm1242, %v1279, %v1280
        %v1282 = vrot.slane %v1280, 4
        %v1283 = vrot.slane %v240, 5
        %v1284 = vsel %vm1242, %v1282, %v1283
        %v1285 = vrot.slane %v241, 5
        %v1286 = vrot.slane %v1285, 4
        %v1287 = vrot.slane %v242, 5
        %v1288 = vsel %vm1242, %v1286, %v1287
        %v1289 = vrot.slane %v1287, 4
        %v1290 = vrot.slane %v243, 5
        %v1291 = vsel %vm1242, %v1289, %v1290
        %v1292 = vrot.slane %v244, 5
        %v1293 = vrot.slane %v1292, 4
        %v1294 = vrot.slane %v245, 5
        %v1295 = vsel %vm1242, %v1293, %v1294
        %v1296 = vrot.slane %v1294, 4
        %v1297 = vrot.slane %v246, 5
        %v1298 = vsel %vm1242, %v1296, %v1297
        %v1299 = vrot.slane %v247, 5
        %v1300 = vrot.slane %v1299, 4
        %v1301 = vrot.slane %v248, 5
        %v1302 = vsel %vm1242, %v1300, %v1301
        %v1303 = vrot.slane %v1301, 4
        %v1304 = vrot.slane %v249, 5
        %v1305 = vsel %vm1242, %v1303, %v1304
        %v1306 = vrot.slane %v250, 5
        %v1307 = vrot.slane %v1306, 4
        %v1308 = vrot.slane %v251, 5
        %v1309 = vsel %vm1242, %v1307, %v1308
        %v1310 = vrot.slane %v1308, 4
        %v1311 = vrot.slane %v252, 5
        %v1312 = vsel %vm1242, %v1310, %v1311
        %v1313 = vrot.slane %v253, 5
        %v1314 = vrot.slane %v1313, 4
        %v1315 = vrot.slane %v254, 5
        %v1316 = vsel %vm1242, %v1314, %v1315
        %v1317 = vrot.slane %v1315, 4
        %v1318 = vrot.slane %v255, 5
        %v1319 = vsel %vm1242, %v1317, %v1318
        %v1320 = vrot.slane %v256, 5
        %v1321 = vrot.slane %v1320, 4
        %v1322 = vrot.slane %v257, 5
        %v1323 = vsel %vm1242, %v1321, %v1322
        %v1324 = vrot.slane %v1322, 4
        %v1325 = vrot.slane %v258, 5
        %v1326 = vsel %vm1242, %v1324, %v1325
        %v1327 = vrot.slane %v259, 5
        %v1328 = vrot.slane %v1327, 4
        %v1329 = vrot.slane %v260, 5
        %v1330 = vsel %vm1242, %v1328, %v1329
        %v1331 = vrot.slane %v1329, 4
        %v1332 = vrot.slane %v261, 5
        %v1333 = vsel %vm1242, %v1331, %v1332
        %v1334 = vrot.slane %v262, 5
        %v1335 = vrot.slane %v1334, 4
        %v1336 = vrot.slane %v263, 5
        %v1337 = vsel %vm1242, %v1335, %v1336
        %v1338 = vrot.slane %v1336, 4
        %v1339 = vrot.slane %v264, 5
        %v1340 = vsel %vm1242, %v1338, %v1339
        %v1341 = vrot.slane %v265, 5
        %v1342 = vrot.slane %v1341, 4
        %v1343 = vrot.slane %v266, 5
        %v1344 = vsel %vm1242, %v1342, %v1343
        %v1345 = vrot.slane %v1343, 4
        %v1346 = vrot.slane %v267, 5
        %v1347 = vsel %vm1242, %v1345, %v1346
        %v1348 = vrot.slane %v268, 5
        %v1349 = vrot.slane %v1348, 4
        %v1350 = vrot.slane %v269, 5
        %v1351 = vsel %vm1242, %v1349, %v1350
        %v1352 = vrot.slane %v1350, 4
        %v1353 = vrot.slane %v270, 5
        %v1354 = vsel %vm1242, %v1352, %v1353
        %v1355 = vld [vmem:[%s1 + $0x4] sm:$0x3]
        %v1356 = vunpack.c.l.b16 %v1246
        %v1357 = vunpack.c.l.b16 %v1249
        %v1358 = vunpack.c.l.b16 %v1253
        %v1359 = vunpack.c.l.b16 %v1256
        %v1360 = vunpack.c.l.b16 %v1260
        %v1361 = vunpack.c.l.b16 %v1263
        %v1362 = vunpack.c.l.b16 %v1267
        %v1363 = vunpack.c.l.b16 %v1270
        %v1364 = vunpack.c.l.b16 %v1274
        %v1365 = vunpack.c.l.b16 %v1277
        %v1366 = vunpack.c.l.b16 %v1281
        %v1367 = vunpack.c.l.b16 %v1284
        %v1368 = vunpack.c.l.b16 %v1288
        %v1369 = vunpack.c.l.b16 %v1291
        %v1370 = vunpack.c.l.b16 %v1295
        %v1371 = vunpack.c.l.b16 %v1298
        %v1372 = vunpack.c.l.b16 %v1302
        %v1373 = vunpack.c.l.b16 %v1305
        %v1374 = vunpack.c.l.b16 %v1309
        %v1375 = vunpack.c.l.b16 %v1312
        %v1376 = vunpack.c.l.b16 %v1316
        %v1377 = vunpack.c.l.b16 %v1319
        %v1378 = vunpack.c.l.b16 %v1323
        %v1379 = vunpack.c.l.b16 %v1326
        %v1380 = vunpack.c.l.b16 %v1330
        %v1381 = vunpack.c.l.b16 %v1333
        %v1382 = vunpack.c.l.b16 %v1337
        %v1383 = vunpack.c.l.b16 %v1340
        %v1384 = vunpack.c.l.b16 %v1344
        %v1385 = vunpack.c.l.b16 %v1347
        %v1386 = vunpack.c.l.b16 %v1351
        %v1387 = vunpack.c.l.b16 %v1354
        %v1388 = vpack.c.b16 %v1357, %v1356
        %v1389 = vpack.c.b16 %v1359, %v1358
        %v1390 = vpack.c.b16 %v1361, %v1360
        %v1391 = vpack.c.b16 %v1363, %v1362
        %v1392 = vpack.c.b16 %v1365, %v1364
        %v1393 = vpack.c.b16 %v1367, %v1366
        %v1394 = vpack.c.b16 %v1369, %v1368
        %v1395 = vpack.c.b16 %v1371, %v1370
        %v1396 = vpack.c.b16 %v1373, %v1372
        %v1397 = vpack.c.b16 %v1375, %v1374
        %v1398 = vpack.c.b16 %v1377, %v1376
        %v1399 = vpack.c.b16 %v1379, %v1378
        %v1400 = vpack.c.b16 %v1381, %v1380
        %v1401 = vpack.c.b16 %v1383, %v1382
        %v1402 = vpack.c.b16 %v1385, %v1384
        %v1403 = vpack.c.b16 %v1387, %v1386
        %v1405 = vsel %vm718, %v1388, 0
        %v1408 = vsel %vm718, %v1389, 0
        %v1411 = vsel %vm718, %v1390, 0
        %v1414 = vsel %vm718, %v1391, 0
        %v1417 = vsel %vm718, %v1392, 0
        %v1420 = vsel %vm718, %v1393, 0
        %v1423 = vsel %vm718, %v1394, 0
        %v1426 = vsel %vm718, %v1395, 0
        %v1429 = vsel %vm718, %v1396, 0
        %v1432 = vsel %vm718, %v1397, 0
        %v1435 = vsel %vm718, %v1398, 0
        %v1438 = vsel %vm718, %v1399, 0
        %v1441 = vsel %vm718, %v1400, 0
        %v1444 = vsel %vm718, %v1401, 0
        %v1447 = vsel %vm718, %v1402, 0
        %v1450 = vsel %vm718, %v1403, 0
        %v1453 = vsel %vm767, %v1355, 0
        %1455 = vmatprep.subr.bf16.mxu0 0
        %1456 = vmatpush1.bf16.msra.mxu0 0
        %1457 = vmatprep.subr.bf16.mxu0 0
        %1458 = vmatpush1.bf16.msra.mxu0 0
        %1459 = vmatprep.subr.bf16.mxu0 0
        %1460 = vmatpush1.bf16.msra.mxu0 0
        %1461 = vmatprep.subr.bf16.mxu0 0
        %1462 = vmatpush1.bf16.msra.mxu0 0
        %1463 = vmatprep.subr.bf16.mxu0 0
        %1464 = vmatpush1.bf16.msra.mxu0 0
        %1465 = vmatprep.subr.bf16.mxu0 0
        %1466 = vmatpush1.bf16.msra.mxu0 0
        %1467 = vmatprep.subr.bf16.mxu0 0
        %1468 = vmatpush1.bf16.msra.mxu0 0
        %1469 = vmatprep.subr.bf16.mxu0 0
        %1470 = vmatpush1.bf16.msra.mxu0 %v1453
        %1471 = vmatprep.subr.bf16.mxu0 0
        %1472 = vmatpush2.bf16.msra.mxu0 0
        %1473 = vmatprep.subr.bf16.mxu0 0
        %1474 = vmatpush2.bf16.msra.mxu0 0
        %1475 = vmatprep.subr.bf16.mxu0 0
        %1476 = vmatpush2.bf16.msra.mxu0 0
        %1477 = vmatprep.subr.bf16.mxu0 0
        %1478 = vmatpush2.bf16.msra.mxu0 0
        %1479 = vmatprep.subr.bf16.mxu0 0
        %1480 = vmatpush2.bf16.msra.mxu0 0
        %1481 = vmatprep.subr.bf16.mxu0 0
        %1482 = vmatpush2.bf16.msra.mxu0 0
        %1483 = vmatprep.subr.bf16.mxu0 0
        %1484 = vmatpush2.bf16.msra.mxu0 0
        %1485 = vmatprep.subr.bf16.mxu0 0
        %1486 = vmatpush2.bf16.msra.mxu0 0
        %1487 = vmatprep.mubr.bf16.mxu0 0
        %1488 = vmatmul.mubr.bf16.gmra.mxu0 %v1405
        %v1489 = vpop.f32.mrf.mxu0
        %v1490 = vadd.f32 0.0, %v1489
        %v1491 = vpop.f32.mrf.mxu0
        %v1492 = vpop.f32.mrf.mxu0
        %v1493 = vadd.f32 0.0, %v1492
        %v1494 = vpop.f32.mrf.mxu0
        %1495 = vmatprep.mubr.bf16.mxu0 0
        %1496 = vmatmul.mubr.bf16.gmra.mxu0 %v1408
        %v1497 = vpop.f32.mrf.mxu0
        %v1498 = vadd.f32 0.0, %v1497
        %v1499 = vpop.f32.mrf.mxu0
        %v1500 = vpop.f32.mrf.mxu0
        %v1501 = vadd.f32 0.0, %v1500
        %v1502 = vpop.f32.mrf.mxu0
        %1503 = vmatprep.mubr.bf16.mxu0 0
        %1504 = vmatmul.mubr.bf16.gmra.mxu0 %v1411
        %v1505 = vpop.f32.mrf.mxu0
        %v1506 = vadd.f32 0.0, %v1505
        %v1507 = vpop.f32.mrf.mxu0
        %v1508 = vpop.f32.mrf.mxu0
        %v1509 = vadd.f32 0.0, %v1508
        %v1510 = vpop.f32.mrf.mxu0
        %1511 = vmatprep.mubr.bf16.mxu0 0
        %1512 = vmatmul.mubr.bf16.gmra.mxu0 %v1414
        %v1513 = vpop.f32.mrf.mxu0
        %v1514 = vadd.f32 0.0, %v1513
        %v1515 = vpop.f32.mrf.mxu0
        %v1516 = vpop.f32.mrf.mxu0
        %v1517 = vadd.f32 0.0, %v1516
        %v1518 = vpop.f32.mrf.mxu0
        %1519 = vmatprep.mubr.bf16.mxu0 0
        %1520 = vmatmul.mubr.bf16.gmra.mxu0 %v1417
        %v1521 = vpop.f32.mrf.mxu0
        %v1522 = vadd.f32 0.0, %v1521
        %v1523 = vpop.f32.mrf.mxu0
        %v1524 = vpop.f32.mrf.mxu0
        %v1525 = vadd.f32 0.0, %v1524
        %v1526 = vpop.f32.mrf.mxu0
        %1527 = vmatprep.mubr.bf16.mxu0 0
        %1528 = vmatmul.mubr.bf16.gmra.mxu0 %v1420
        %v1529 = vpop.f32.mrf.mxu0
        %v1530 = vadd.f32 0.0, %v1529
        %v1531 = vpop.f32.mrf.mxu0
        %v1532 = vpop.f32.mrf.mxu0
        %v1533 = vadd.f32 0.0, %v1532
        %v1534 = vpop.f32.mrf.mxu0
        %1535 = vmatprep.mubr.bf16.mxu0 0
        %1536 = vmatmul.mubr.bf16.gmra.mxu0 %v1423
        %v1537 = vpop.f32.mrf.mxu0
        %v1538 = vadd.f32 0.0, %v1537
        %v1539 = vpop.f32.mrf.mxu0
        %v1540 = vpop.f32.mrf.mxu0
        %v1541 = vadd.f32 0.0, %v1540
        %v1542 = vpop.f32.mrf.mxu0
        %1543 = vmatprep.mubr.bf16.mxu0 0
        %1544 = vmatmul.mubr.bf16.gmra.mxu0 %v1426
        %v1545 = vpop.f32.mrf.mxu0
        %v1546 = vadd.f32 0.0, %v1545
        %v1547 = vpop.f32.mrf.mxu0
        %v1548 = vpop.f32.mrf.mxu0
        %v1549 = vadd.f32 0.0, %v1548
        %v1550 = vpop.f32.mrf.mxu0
        %1551 = vmatprep.mubr.bf16.mxu0 0
        %1552 = vmatmul.mubr.bf16.gmra.mxu0 %v1429
        %v1553 = vpop.f32.mrf.mxu0
        %v1554 = vadd.f32 0.0, %v1553
        %v1555 = vpop.f32.mrf.mxu0
        %v1556 = vpop.f32.mrf.mxu0
        %v1557 = vadd.f32 0.0, %v1556
        %v1558 = vpop.f32.mrf.mxu0
        %1559 = vmatprep.mubr.bf16.mxu0 0
        %1560 = vmatmul.mubr.bf16.gmra.mxu0 %v1432
        %v1561 = vpop.f32.mrf.mxu0
        %v1562 = vadd.f32 0.0, %v1561
        %v1563 = vpop.f32.mrf.mxu0
        %v1564 = vpop.f32.mrf.mxu0
        %v1565 = vadd.f32 0.0, %v1564
        %v1566 = vpop.f32.mrf.mxu0
        %1567 = vmatprep.mubr.bf16.mxu0 0
        %1568 = vmatmul.mubr.bf16.gmra.mxu0 %v1435
        %v1569 = vpop.f32.mrf.mxu0
        %v1570 = vadd.f32 0.0, %v1569
        %v1571 = vpop.f32.mrf.mxu0
        %v1572 = vpop.f32.mrf.mxu0
        %v1573 = vadd.f32 0.0, %v1572
        %v1574 = vpop.f32.mrf.mxu0
        %1575 = vmatprep.mubr.bf16.mxu0 0
        %1576 = vmatmul.mubr.bf16.gmra.mxu0 %v1438
        %v1577 = vpop.f32.mrf.mxu0
        %v1578 = vadd.f32 0.0, %v1577
        %v1579 = vpop.f32.mrf.mxu0
        %v1580 = vpop.f32.mrf.mxu0
        %v1581 = vadd.f32 0.0, %v1580
        %v1582 = vpop.f32.mrf.mxu0
        %1583 = vmatprep.mubr.bf16.mxu0 0
        %1584 = vmatmul.mubr.bf16.gmra.mxu0 %v1441
        %v1585 = vpop.f32.mrf.mxu0
        %v1586 = vadd.f32 0.0, %v1585
        %v1587 = vpop.f32.mrf.mxu0
        %v1588 = vpop.f32.mrf.mxu0
        %v1589 = vadd.f32 0.0, %v1588
        %v1590 = vpop.f32.mrf.mxu0
        %1591 = vmatprep.mubr.bf16.mxu0 0
        %1592 = vmatmul.mubr.bf16.gmra.mxu0 %v1444
        %v1593 = vpop.f32.mrf.mxu0
        %v1594 = vadd.f32 0.0, %v1593
        %v1595 = vpop.f32.mrf.mxu0
        %v1596 = vpop.f32.mrf.mxu0
        %v1597 = vadd.f32 0.0, %v1596
        %v1598 = vpop.f32.mrf.mxu0
        %1599 = vmatprep.mubr.bf16.mxu0 0
        %1600 = vmatmul.mubr.bf16.gmra.mxu0 %v1447
        %v1601 = vpop.f32.mrf.mxu0
        %v1602 = vadd.f32 0.0, %v1601
        %v1603 = vpop.f32.mrf.mxu0
        %v1604 = vpop.f32.mrf.mxu0
        %v1605 = vadd.f32 0.0, %v1604
        %v1606 = vpop.f32.mrf.mxu0
        %1607 = vmatprep.mubr.bf16.mxu0 0
        %1608 = vmatmul.mubr.bf16.gmra.mxu0 %v1450
        %v1609 = vpop.f32.mrf.mxu0
        %v1610 = vadd.f32 0.0, %v1609
        %v1611 = vpop.f32.mrf.mxu0
        %v1612 = vpop.f32.mrf.mxu0
        %v1613 = vadd.f32 0.0, %v1612
        %v1614 = vpop.f32.mrf.mxu0
        %1615 = vdwg.mxu0
        %v1616 = vadd.f32 %v1098, %v1490
        %v1617 = vadd.f32 %v1101, %v1493
        %v1618 = vadd.f32 %v1106, %v1498
        %v1619 = vadd.f32 %v1109, %v1501
        %v1620 = vadd.f32 %v1114, %v1506
        %v1621 = vadd.f32 %v1117, %v1509
        %v1622 = vadd.f32 %v1122, %v1514
        %v1623 = vadd.f32 %v1125, %v1517
        %v1624 = vadd.f32 %v1130, %v1522
        %v1625 = vadd.f32 %v1133, %v1525
        %v1626 = vadd.f32 %v1138, %v1530
        %v1627 = vadd.f32 %v1141, %v1533
        %v1628 = vadd.f32 %v1146, %v1538
        %v1629 = vadd.f32 %v1149, %v1541
        %v1630 = vadd.f32 %v1154, %v1546
        %v1631 = vadd.f32 %v1157, %v1549
        %v1632 = vadd.f32 %v1162, %v1554
        %v1633 = vadd.f32 %v1165, %v1557
        %v1634 = vadd.f32 %v1170, %v1562
        %v1635 = vadd.f32 %v1173, %v1565
        %v1636 = vadd.f32 %v1178, %v1570
        %v1637 = vadd.f32 %v1181, %v1573
        %v1638 = vadd.f32 %v1186, %v1578
        %v1639 = vadd.f32 %v1189, %v1581
        %v1640 = vadd.f32 %v1194, %v1586
        %v1641 = vadd.f32 %v1197, %v1589
        %v1642 = vadd.f32 %v1202, %v1594
        %v1643 = vadd.f32 %v1205, %v1597
        %v1644 = vadd.f32 %v1210, %v1602
        %v1645 = vadd.f32 %v1213, %v1605
        %v1646 = vadd.f32 %v1218, %v1610
        %v1647 = vadd.f32 %v1221, %v1613
        %v1648 = vld [vmem:[%s1 + $0x4] sm:$0xc]
        %v1651 = vunpack.c.l.b16 %v271
        %v1652 = vunpack.c.l.b16 %v272
        %v1653 = vpack.c.b16 %v1652, %v1651
        %v1655 = vunpack.c.l.b16 %v1648
        %v1656 = vpack.c.b16 %v1655, %v1655
        %v1657 = vrot.slane %v1656, 2
        %v1659 = vsel %vm718, %v1653, 0
        %v1662 = vsel %vm767, %v1657, 0
        %1664 = vmatprep.subr.bf16.mxu0 0
        %1665 = vmatpush1.bf16.msra.mxu0 0
        %1666 = vmatprep.subr.bf16.mxu0 0
        %1667 = vmatpush1.bf16.msra.mxu0 0
        %1668 = vmatprep.subr.bf16.mxu0 0
        %1669 = vmatpush1.bf16.msra.mxu0 0
        %1670 = vmatprep.subr.bf16.mxu0 0
        %1671 = vmatpush1.bf16.msra.mxu0 0
        %1672 = vmatprep.subr.bf16.mxu0 0
        %1673 = vmatpush1.bf16.msra.mxu0 0
        %1674 = vmatprep.subr.bf16.mxu0 0
        %1675 = vmatpush1.bf16.msra.mxu0 0
        %1676 = vmatprep.subr.bf16.mxu0 0
        %1677 = vmatpush1.bf16.msra.mxu0 0
        %1678 = vmatprep.subr.bf16.mxu0 0
        %1679 = vmatpush1.bf16.msra.mxu0 %v1662
        %1680 = vmatprep.subr.bf16.mxu0 0
        %1681 = vmatpush2.bf16.msra.mxu0 0
        %1682 = vmatprep.subr.bf16.mxu0 0
        %1683 = vmatpush2.bf16.msra.mxu0 0
        %1684 = vmatprep.subr.bf16.mxu0 0
        %1685 = vmatpush2.bf16.msra.mxu0 0
        %1686 = vmatprep.subr.bf16.mxu0 0
        %1687 = vmatpush2.bf16.msra.mxu0 0
        %1688 = vmatprep.subr.bf16.mxu0 0
        %1689 = vmatpush2.bf16.msra.mxu0 0
        %1690 = vmatprep.subr.bf16.mxu0 0
        %1691 = vmatpush2.bf16.msra.mxu0 0
        %1692 = vmatprep.subr.bf16.mxu0 0
        %1693 = vmatpush2.bf16.msra.mxu0 0
        %1694 = vmatprep.subr.bf16.mxu0 0
        %1695 = vmatpush2.bf16.msra.mxu0 0
        %1696 = vmatprep.mubr.bf16.mxu0 0
        %1697 = vmatmul.mubr.bf16.gmra.mxu0 %v1016
        %v1698 = vpop.f32.mrf.mxu0
        %v1699 = vadd.f32 0.0, %v1698
        %v1700 = vpop.f32.mrf.mxu0
        %v1701 = vpop.f32.mrf.mxu0
        %v1702 = vadd.f32 0.0, %v1701
        %v1703 = vpop.f32.mrf.mxu0
        %1704 = vmatprep.mubr.bf16.mxu0 0
        %1705 = vmatmul.mubr.bf16.gmra.mxu0 %v1019
        %v1706 = vpop.f32.mrf.mxu0
        %v1707 = vadd.f32 0.0, %v1706
        %v1708 = vpop.f32.mrf.mxu0
        %v1709 = vpop.f32.mrf.mxu0
        %v1710 = vadd.f32 0.0, %v1709
        %v1711 = vpop.f32.mrf.mxu0
        %1712 = vmatprep.mubr.bf16.mxu0 0
        %1713 = vmatmul.mubr.bf16.gmra.mxu0 %v1022
        %v1714 = vpop.f32.mrf.mxu0
        %v1715 = vadd.f32 0.0, %v1714
        %v1716 = vpop.f32.mrf.mxu0
        %v1717 = vpop.f32.mrf.mxu0
        %v1718 = vadd.f32 0.0, %v1717
        %v1719 = vpop.f32.mrf.mxu0
        %1720 = vmatprep.mubr.bf16.mxu0 0
        %1721 = vmatmul.mubr.bf16.gmra.mxu0 %v1025
        %v1722 = vpop.f32.mrf.mxu0
        %v1723 = vadd.f32 0.0, %v1722
        %v1724 = vpop.f32.mrf.mxu0
        %v1725 = vpop.f32.mrf.mxu0
        %v1726 = vadd.f32 0.0, %v1725
        %v1727 = vpop.f32.mrf.mxu0
        %1728 = vmatprep.mubr.bf16.mxu0 0
        %1729 = vmatmul.mubr.bf16.gmra.mxu0 %v1028
        %v1730 = vpop.f32.mrf.mxu0
        %v1731 = vadd.f32 0.0, %v1730
        %v1732 = vpop.f32.mrf.mxu0
        %v1733 = vpop.f32.mrf.mxu0
        %v1734 = vadd.f32 0.0, %v1733
        %v1735 = vpop.f32.mrf.mxu0
        %1736 = vmatprep.mubr.bf16.mxu0 0
        %1737 = vmatmul.mubr.bf16.gmra.mxu0 %v1031
        %v1738 = vpop.f32.mrf.mxu0
        %v1739 = vadd.f32 0.0, %v1738
        %v1740 = vpop.f32.mrf.mxu0
        %v1741 = vpop.f32.mrf.mxu0
        %v1742 = vadd.f32 0.0, %v1741
        %v1743 = vpop.f32.mrf.mxu0
        %1744 = vmatprep.mubr.bf16.mxu0 0
        %1745 = vmatmul.mubr.bf16.gmra.mxu0 %v1034
        %v1746 = vpop.f32.mrf.mxu0
        %v1747 = vadd.f32 0.0, %v1746
        %v1748 = vpop.f32.mrf.mxu0
        %v1749 = vpop.f32.mrf.mxu0
        %v1750 = vadd.f32 0.0, %v1749
        %v1751 = vpop.f32.mrf.mxu0
        %1752 = vmatprep.mubr.bf16.mxu0 0
        %1753 = vmatmul.mubr.bf16.gmra.mxu0 %v1037
        %v1754 = vpop.f32.mrf.mxu0
        %v1755 = vadd.f32 0.0, %v1754
        %v1756 = vpop.f32.mrf.mxu0
        %v1757 = vpop.f32.mrf.mxu0
        %v1758 = vadd.f32 0.0, %v1757
        %v1759 = vpop.f32.mrf.mxu0
        %1760 = vmatprep.mubr.bf16.mxu0 0
        %1761 = vmatmul.mubr.bf16.gmra.mxu0 %v1040
        %v1762 = vpop.f32.mrf.mxu0
        %v1763 = vadd.f32 0.0, %v1762
        %v1764 = vpop.f32.mrf.mxu0
        %v1765 = vpop.f32.mrf.mxu0
        %v1766 = vadd.f32 0.0, %v1765
        %v1767 = vpop.f32.mrf.mxu0
        %1768 = vmatprep.mubr.bf16.mxu0 0
        %1769 = vmatmul.mubr.bf16.gmra.mxu0 %v1043
        %v1770 = vpop.f32.mrf.mxu0
        %v1771 = vadd.f32 0.0, %v1770
        %v1772 = vpop.f32.mrf.mxu0
        %v1773 = vpop.f32.mrf.mxu0
        %v1774 = vadd.f32 0.0, %v1773
        %v1775 = vpop.f32.mrf.mxu0
        %1776 = vmatprep.mubr.bf16.mxu0 0
        %1777 = vmatmul.mubr.bf16.gmra.mxu0 %v1046
        %v1778 = vpop.f32.mrf.mxu0
        %v1779 = vadd.f32 0.0, %v1778
        %v1780 = vpop.f32.mrf.mxu0
        %v1781 = vpop.f32.mrf.mxu0
        %v1782 = vadd.f32 0.0, %v1781
        %v1783 = vpop.f32.mrf.mxu0
        %1784 = vmatprep.mubr.bf16.mxu0 0
        %1785 = vmatmul.mubr.bf16.gmra.mxu0 %v1049
        %v1786 = vpop.f32.mrf.mxu0
        %v1787 = vadd.f32 0.0, %v1786
        %v1788 = vpop.f32.mrf.mxu0
        %v1789 = vpop.f32.mrf.mxu0
        %v1790 = vadd.f32 0.0, %v1789
        %v1791 = vpop.f32.mrf.mxu0
        %1792 = vmatprep.mubr.bf16.mxu0 0
        %1793 = vmatmul.mubr.bf16.gmra.mxu0 %v1052
        %v1794 = vpop.f32.mrf.mxu0
        %v1795 = vadd.f32 0.0, %v1794
        %v1796 = vpop.f32.mrf.mxu0
        %v1797 = vpop.f32.mrf.mxu0
        %v1798 = vadd.f32 0.0, %v1797
        %v1799 = vpop.f32.mrf.mxu0
        %1800 = vmatprep.mubr.bf16.mxu0 0
        %1801 = vmatmul.mubr.bf16.gmra.mxu0 %v1055
        %v1802 = vpop.f32.mrf.mxu0
        %v1803 = vadd.f32 0.0, %v1802
        %v1804 = vpop.f32.mrf.mxu0
        %v1805 = vpop.f32.mrf.mxu0
        %v1806 = vadd.f32 0.0, %v1805
        %v1807 = vpop.f32.mrf.mxu0
        %1808 = vmatprep.mubr.bf16.mxu0 0
        %1809 = vmatmul.mubr.bf16.gmra.mxu0 %v1058
        %v1810 = vpop.f32.mrf.mxu0
        %v1811 = vadd.f32 0.0, %v1810
        %v1812 = vpop.f32.mrf.mxu0
        %v1813 = vpop.f32.mrf.mxu0
        %v1814 = vadd.f32 0.0, %v1813
        %v1815 = vpop.f32.mrf.mxu0
        %1816 = vmatprep.mubr.bf16.mxu0 0
        %1817 = vmatmul.mubr.bf16.gmra.mxu0 %v1659
        %v1818 = vpop.f32.mrf.mxu0
        %v1819 = vadd.f32 0.0, %v1818
        %v1820 = vpop.f32.mrf.mxu0
        %v1821 = vpop.f32.mrf.mxu0
        %v1822 = vadd.f32 0.0, %v1821
        %v1823 = vpop.f32.mrf.mxu0
        %1824 = vdwg.mxu0
        %v1825 = vadd.f32 %v1616, %v1699
        %v1826 = vadd.f32 %v1617, %v1702
        %v1827 = vadd.f32 %v1618, %v1707
        %v1828 = vadd.f32 %v1619, %v1710
        %v1829 = vadd.f32 %v1620, %v1715
        %v1830 = vadd.f32 %v1621, %v1718
        %v1831 = vadd.f32 %v1622, %v1723
        %v1832 = vadd.f32 %v1623, %v1726
        %v1833 = vadd.f32 %v1624, %v1731
        %v1834 = vadd.f32 %v1625, %v1734
        %v1835 = vadd.f32 %v1626, %v1739
        %v1836 = vadd.f32 %v1627, %v1742
        %v1837 = vadd.f32 %v1628, %v1747
        %v1838 = vadd.f32 %v1629, %v1750
        %v1839 = vadd.f32 %v1630, %v1755
        %v1840 = vadd.f32 %v1631, %v1758
        %v1841 = vadd.f32 %v1632, %v1763
        %v1842 = vadd.f32 %v1633, %v1766
        %v1843 = vadd.f32 %v1634, %v1771
        %v1844 = vadd.f32 %v1635, %v1774
        %v1845 = vadd.f32 %v1636, %v1779
        %v1846 = vadd.f32 %v1637, %v1782
        %v1847 = vadd.f32 %v1638, %v1787
        %v1848 = vadd.f32 %v1639, %v1790
        %v1849 = vadd.f32 %v1640, %v1795
        %v1850 = vadd.f32 %v1641, %v1798
        %v1851 = vadd.f32 %v1642, %v1803
        %v1852 = vadd.f32 %v1643, %v1806
        %v1853 = vadd.f32 %v1644, %v1811
        %v1854 = vadd.f32 %v1645, %v1814
        %v1855 = vadd.f32 %v1646, %v1819
        %v1856 = vadd.f32 %v1647, %v1822
        %v1858 = vshrl.u32 %v271, 16
        %v1860 = vrot.slane %v1858, 4
        %v1861 = vshll.u32 %v271, 16
        %v1863 = vrot.slane %v1861, 5
        %v1864 = vor.u32 %v1860, %v1863
        %v1865 = vrot.slane %v1864, 4
        %v1867 = vshll.u32 %v272, 16
        %v1869 = vrot.slane %v1867, 5
        %v1870 = vsel %vm280, %v1865, %v1869
        %v1871 = vshrl.u32 %v272, 16
        %v1873 = vrot.slane %v1871, 4
        %v1874 = vor.u32 %v1873, %v1869
        %v1875 = vrot.slane %v1874, 4
        %v1877 = vshll.u32 %v273, 16
        %v1879 = vrot.slane %v1877, 5
        %v1880 = vsel %vm280, %v1875, %v1879
        %v1881 = vld [vmem:[%s1 + $0x8] sm:$0x3]
        %v1882 = vunpack.c.l.b16 %v1870
        %v1883 = vunpack.c.l.b16 %v1880
        %v1884 = vpack.c.b16 %v1883, %v1882
        %v1886 = vsel %vm718, %v1884, 0
        %v1889 = vsel %vm767, %v1881, 0
        %1891 = vmatprep.subr.bf16.mxu0 0
        %1892 = vmatpush1.bf16.msra.mxu0 0
        %1893 = vmatprep.subr.bf16.mxu0 0
        %1894 = vmatpush1.bf16.msra.mxu0 0
        %1895 = vmatprep.subr.bf16.mxu0 0
        %1896 = vmatpush1.bf16.msra.mxu0 0
        %1897 = vmatprep.subr.bf16.mxu0 0
        %1898 = vmatpush1.bf16.msra.mxu0 0
        %1899 = vmatprep.subr.bf16.mxu0 0
        %1900 = vmatpush1.bf16.msra.mxu0 0
        %1901 = vmatprep.subr.bf16.mxu0 0
        %1902 = vmatpush1.bf16.msra.mxu0 0
        %1903 = vmatprep.subr.bf16.mxu0 0
        %1904 = vmatpush1.bf16.msra.mxu0 0
        %1905 = vmatprep.subr.bf16.mxu0 0
        %1906 = vmatpush1.bf16.msra.mxu0 %v1889
        %1907 = vmatprep.subr.bf16.mxu0 0
        %1908 = vmatpush2.bf16.msra.mxu0 0
        %1909 = vmatprep.subr.bf16.mxu0 0
        %1910 = vmatpush2.bf16.msra.mxu0 0
        %1911 = vmatprep.subr.bf16.mxu0 0
        %1912 = vmatpush2.bf16.msra.mxu0 0
        %1913 = vmatprep.subr.bf16.mxu0 0
        %1914 = vmatpush2.bf16.msra.mxu0 0
        %1915 = vmatprep.subr.bf16.mxu0 0
        %1916 = vmatpush2.bf16.msra.mxu0 0
        %1917 = vmatprep.subr.bf16.mxu0 0
        %1918 = vmatpush2.bf16.msra.mxu0 0
        %1919 = vmatprep.subr.bf16.mxu0 0
        %1920 = vmatpush2.bf16.msra.mxu0 0
        %1921 = vmatprep.subr.bf16.mxu0 0
        %1922 = vmatpush2.bf16.msra.mxu0 0
        %1923 = vmatprep.mubr.bf16.mxu0 0
        %1924 = vmatmul.mubr.bf16.gmra.mxu0 %v723
        %v1925 = vpop.f32.mrf.mxu0
        %v1926 = vadd.f32 0.0, %v1925
        %v1927 = vpop.f32.mrf.mxu0
        %v1928 = vpop.f32.mrf.mxu0
        %v1929 = vadd.f32 0.0, %v1928
        %v1930 = vpop.f32.mrf.mxu0
        %1931 = vmatprep.mubr.bf16.mxu0 0
        %1932 = vmatmul.mubr.bf16.gmra.mxu0 %v726
        %v1933 = vpop.f32.mrf.mxu0
        %v1934 = vadd.f32 0.0, %v1933
        %v1935 = vpop.f32.mrf.mxu0
        %v1936 = vpop.f32.mrf.mxu0
        %v1937 = vadd.f32 0.0, %v1936
        %v1938 = vpop.f32.mrf.mxu0
        %1939 = vmatprep.mubr.bf16.mxu0 0
        %1940 = vmatmul.mubr.bf16.gmra.mxu0 %v729
        %v1941 = vpop.f32.mrf.mxu0
        %v1942 = vadd.f32 0.0, %v1941
        %v1943 = vpop.f32.mrf.mxu0
        %v1944 = vpop.f32.mrf.mxu0
        %v1945 = vadd.f32 0.0, %v1944
        %v1946 = vpop.f32.mrf.mxu0
        %1947 = vmatprep.mubr.bf16.mxu0 0
        %1948 = vmatmul.mubr.bf16.gmra.mxu0 %v732
        %v1949 = vpop.f32.mrf.mxu0
        %v1950 = vadd.f32 0.0, %v1949
        %v1951 = vpop.f32.mrf.mxu0
        %v1952 = vpop.f32.mrf.mxu0
        %v1953 = vadd.f32 0.0, %v1952
        %v1954 = vpop.f32.mrf.mxu0
        %1955 = vmatprep.mubr.bf16.mxu0 0
        %1956 = vmatmul.mubr.bf16.gmra.mxu0 %v735
        %v1957 = vpop.f32.mrf.mxu0
        %v1958 = vadd.f32 0.0, %v1957
        %v1959 = vpop.f32.mrf.mxu0
        %v1960 = vpop.f32.mrf.mxu0
        %v1961 = vadd.f32 0.0, %v1960
        %v1962 = vpop.f32.mrf.mxu0
        %1963 = vmatprep.mubr.bf16.mxu0 0
        %1964 = vmatmul.mubr.bf16.gmra.mxu0 %v738
        %v1965 = vpop.f32.mrf.mxu0
        %v1966 = vadd.f32 0.0, %v1965
        %v1967 = vpop.f32.mrf.mxu0
        %v1968 = vpop.f32.mrf.mxu0
        %v1969 = vadd.f32 0.0, %v1968
        %v1970 = vpop.f32.mrf.mxu0
        %1971 = vmatprep.mubr.bf16.mxu0 0
        %1972 = vmatmul.mubr.bf16.gmra.mxu0 %v741
        %v1973 = vpop.f32.mrf.mxu0
        %v1974 = vadd.f32 0.0, %v1973
        %v1975 = vpop.f32.mrf.mxu0
        %v1976 = vpop.f32.mrf.mxu0
        %v1977 = vadd.f32 0.0, %v1976
        %v1978 = vpop.f32.mrf.mxu0
        %1979 = vmatprep.mubr.bf16.mxu0 0
        %1980 = vmatmul.mubr.bf16.gmra.mxu0 %v744
        %v1981 = vpop.f32.mrf.mxu0
        %v1982 = vadd.f32 0.0, %v1981
        %v1983 = vpop.f32.mrf.mxu0
        %v1984 = vpop.f32.mrf.mxu0
        %v1985 = vadd.f32 0.0, %v1984
        %v1986 = vpop.f32.mrf.mxu0
        %1987 = vmatprep.mubr.bf16.mxu0 0
        %1988 = vmatmul.mubr.bf16.gmra.mxu0 %v747
        %v1989 = vpop.f32.mrf.mxu0
        %v1990 = vadd.f32 0.0, %v1989
        %v1991 = vpop.f32.mrf.mxu0
        %v1992 = vpop.f32.mrf.mxu0
        %v1993 = vadd.f32 0.0, %v1992
        %v1994 = vpop.f32.mrf.mxu0
        %1995 = vmatprep.mubr.bf16.mxu0 0
        %1996 = vmatmul.mubr.bf16.gmra.mxu0 %v750
        %v1997 = vpop.f32.mrf.mxu0
        %v1998 = vadd.f32 0.0, %v1997
        %v1999 = vpop.f32.mrf.mxu0
        %v2000 = vpop.f32.mrf.mxu0
        %v2001 = vadd.f32 0.0, %v2000
        %v2002 = vpop.f32.mrf.mxu0
        %2003 = vmatprep.mubr.bf16.mxu0 0
        %2004 = vmatmul.mubr.bf16.gmra.mxu0 %v753
        %v2005 = vpop.f32.mrf.mxu0
        %v2006 = vadd.f32 0.0, %v2005
        %v2007 = vpop.f32.mrf.mxu0
        %v2008 = vpop.f32.mrf.mxu0
        %v2009 = vadd.f32 0.0, %v2008
        %v2010 = vpop.f32.mrf.mxu0
        %2011 = vmatprep.mubr.bf16.mxu0 0
        %2012 = vmatmul.mubr.bf16.gmra.mxu0 %v756
        %v2013 = vpop.f32.mrf.mxu0
        %v2014 = vadd.f32 0.0, %v2013
        %v2015 = vpop.f32.mrf.mxu0
        %v2016 = vpop.f32.mrf.mxu0
        %v2017 = vadd.f32 0.0, %v2016
        %v2018 = vpop.f32.mrf.mxu0
        %2019 = vmatprep.mubr.bf16.mxu0 0
        %2020 = vmatmul.mubr.bf16.gmra.mxu0 %v759
        %v2021 = vpop.f32.mrf.mxu0
        %v2022 = vadd.f32 0.0, %v2021
        %v2023 = vpop.f32.mrf.mxu0
        %v2024 = vpop.f32.mrf.mxu0
        %v2025 = vadd.f32 0.0, %v2024
        %v2026 = vpop.f32.mrf.mxu0
        %2027 = vmatprep.mubr.bf16.mxu0 0
        %2028 = vmatmul.mubr.bf16.gmra.mxu0 %v762
        %v2029 = vpop.f32.mrf.mxu0
        %v2030 = vadd.f32 0.0, %v2029
        %v2031 = vpop.f32.mrf.mxu0
        %v2032 = vpop.f32.mrf.mxu0
        %v2033 = vadd.f32 0.0, %v2032
        %v2034 = vpop.f32.mrf.mxu0
        %2035 = vmatprep.mubr.bf16.mxu0 0
        %2036 = vmatmul.mubr.bf16.gmra.mxu0 %v765
        %v2037 = vpop.f32.mrf.mxu0
        %v2038 = vadd.f32 0.0, %v2037
        %v2039 = vpop.f32.mrf.mxu0
        %v2040 = vpop.f32.mrf.mxu0
        %v2041 = vadd.f32 0.0, %v2040
        %v2042 = vpop.f32.mrf.mxu0
        %2043 = vmatprep.mubr.bf16.mxu0 0
        %2044 = vmatmul.mubr.bf16.gmra.mxu0 %v1886
        %v2045 = vpop.f32.mrf.mxu0
        %v2046 = vadd.f32 0.0, %v2045
        %v2047 = vpop.f32.mrf.mxu0
        %v2048 = vpop.f32.mrf.mxu0
        %v2049 = vadd.f32 0.0, %v2048
        %v2050 = vpop.f32.mrf.mxu0
        %2051 = vdwg.mxu0
        %v2052 = vadd.f32 %v1825, %v1926
        %v2053 = vadd.f32 %v1826, %v1929
        %v2054 = vadd.f32 %v1827, %v1934
        %v2055 = vadd.f32 %v1828, %v1937
        %v2056 = vadd.f32 %v1829, %v1942
        %v2057 = vadd.f32 %v1830, %v1945
        %v2058 = vadd.f32 %v1831, %v1950
        %v2059 = vadd.f32 %v1832, %v1953
        %v2060 = vadd.f32 %v1833, %v1958
        %v2061 = vadd.f32 %v1834, %v1961
        %v2062 = vadd.f32 %v1835, %v1966
        %v2063 = vadd.f32 %v1836, %v1969
        %v2064 = vadd.f32 %v1837, %v1974
        %v2065 = vadd.f32 %v1838, %v1977
        %v2066 = vadd.f32 %v1839, %v1982
        %v2067 = vadd.f32 %v1840, %v1985
        %v2068 = vadd.f32 %v1841, %v1990
        %v2069 = vadd.f32 %v1842, %v1993
        %v2070 = vadd.f32 %v1843, %v1998
        %v2071 = vadd.f32 %v1844, %v2001
        %v2072 = vadd.f32 %v1845, %v2006
        %v2073 = vadd.f32 %v1846, %v2009
        %v2074 = vadd.f32 %v1847, %v2014
        %v2075 = vadd.f32 %v1848, %v2017
        %v2076 = vadd.f32 %v1849, %v2022
        %v2077 = vadd.f32 %v1850, %v2025
        %v2078 = vadd.f32 %v1851, %v2030
        %v2079 = vadd.f32 %v1852, %v2033
        %v2080 = vadd.f32 %v1853, %v2038
        %v2081 = vadd.f32 %v1854, %v2041
        %v2082 = vadd.f32 %v1855, %v2046
        %v2083 = vadd.f32 %v1856, %v2049
        %v2085 = vrot.slane %v271, 5
        %v2086 = vrot.slane %v2085, 4
        %v2087 = vrot.slane %v272, 5
        %v2088 = vsel %vm1242, %v2086, %v2087
        %v2089 = vrot.slane %v2087, 4
        %v2090 = vrot.slane %v273, 5
        %v2091 = vsel %vm1242, %v2089, %v2090
        %v2092 = vld [vmem:[%s1 + $0x8] sm:$0xc]
        %v2093 = vunpack.c.l.b16 %v2088
        %v2094 = vunpack.c.l.b16 %v2091
        %v2095 = vpack.c.b16 %v2094, %v2093
        %v2097 = vunpack.c.l.b16 %v2092
        %v2098 = vpack.c.b16 %v2097, %v2097
        %v2099 = vrot.slane %v2098, 2
        %v2101 = vsel %vm718, %v2095, 0
        %v2104 = vsel %vm767, %v2099, 0
        %2106 = vmatprep.subr.bf16.mxu0 0
        %2107 = vmatpush1.bf16.msra.mxu0 0
        %2108 = vmatprep.subr.bf16.mxu0 0
        %2109 = vmatpush1.bf16.msra.mxu0 0
        %2110 = vmatprep.subr.bf16.mxu0 0
        %2111 = vmatpush1.bf16.msra.mxu0 0
        %2112 = vmatprep.subr.bf16.mxu0 0
        %2113 = vmatpush1.bf16.msra.mxu0 0
        %2114 = vmatprep.subr.bf16.mxu0 0
        %2115 = vmatpush1.bf16.msra.mxu0 0
        %2116 = vmatprep.subr.bf16.mxu0 0
        %2117 = vmatpush1.bf16.msra.mxu0 0
        %2118 = vmatprep.subr.bf16.mxu0 0
        %2119 = vmatpush1.bf16.msra.mxu0 0
        %2120 = vmatprep.subr.bf16.mxu0 0
        %2121 = vmatpush1.bf16.msra.mxu0 %v2104
        %2122 = vmatprep.subr.bf16.mxu0 0
        %2123 = vmatpush2.bf16.msra.mxu0 0
        %2124 = vmatprep.subr.bf16.mxu0 0
        %2125 = vmatpush2.bf16.msra.mxu0 0
        %2126 = vmatprep.subr.bf16.mxu0 0
        %2127 = vmatpush2.bf16.msra.mxu0 0
        %2128 = vmatprep.subr.bf16.mxu0 0
        %2129 = vmatpush2.bf16.msra.mxu0 0
        %2130 = vmatprep.subr.bf16.mxu0 0
        %2131 = vmatpush2.bf16.msra.mxu0 0
        %2132 = vmatprep.subr.bf16.mxu0 0
        %2133 = vmatpush2.bf16.msra.mxu0 0
        %2134 = vmatprep.subr.bf16.mxu0 0
        %2135 = vmatpush2.bf16.msra.mxu0 0
        %2136 = vmatprep.subr.bf16.mxu0 0
        %2137 = vmatpush2.bf16.msra.mxu0 0
        %2138 = vmatprep.mubr.bf16.mxu0 0
        %2139 = vmatmul.mubr.bf16.gmra.mxu0 %v1408
        %v2140 = vpop.f32.mrf.mxu0
        %v2141 = vadd.f32 0.0, %v2140
        %v2142 = vpop.f32.mrf.mxu0
        %v2143 = vpop.f32.mrf.mxu0
        %v2144 = vadd.f32 0.0, %v2143
        %v2145 = vpop.f32.mrf.mxu0
        %2146 = vmatprep.mubr.bf16.mxu0 0
        %2147 = vmatmul.mubr.bf16.gmra.mxu0 %v1411
        %v2148 = vpop.f32.mrf.mxu0
        %v2149 = vadd.f32 0.0, %v2148
        %v2150 = vpop.f32.mrf.mxu0
        %v2151 = vpop.f32.mrf.mxu0
        %v2152 = vadd.f32 0.0, %v2151
        %v2153 = vpop.f32.mrf.mxu0
        %2154 = vmatprep.mubr.bf16.mxu0 0
        %2155 = vmatmul.mubr.bf16.gmra.mxu0 %v1414
        %v2156 = vpop.f32.mrf.mxu0
        %v2157 = vadd.f32 0.0, %v2156
        %v2158 = vpop.f32.mrf.mxu0
        %v2159 = vpop.f32.mrf.mxu0
        %v2160 = vadd.f32 0.0, %v2159
        %v2161 = vpop.f32.mrf.mxu0
        %2162 = vmatprep.mubr.bf16.mxu0 0
        %2163 = vmatmul.mubr.bf16.gmra.mxu0 %v1417
        %v2164 = vpop.f32.mrf.mxu0
        %v2165 = vadd.f32 0.0, %v2164
        %v2166 = vpop.f32.mrf.mxu0
        %v2167 = vpop.f32.mrf.mxu0
        %v2168 = vadd.f32 0.0, %v2167
        %v2169 = vpop.f32.mrf.mxu0
        %2170 = vmatprep.mubr.bf16.mxu0 0
        %2171 = vmatmul.mubr.bf16.gmra.mxu0 %v1420
        %v2172 = vpop.f32.mrf.mxu0
        %v2173 = vadd.f32 0.0, %v2172
        %v2174 = vpop.f32.mrf.mxu0
        %v2175 = vpop.f32.mrf.mxu0
        %v2176 = vadd.f32 0.0, %v2175
        %v2177 = vpop.f32.mrf.mxu0
        %2178 = vmatprep.mubr.bf16.mxu0 0
        %2179 = vmatmul.mubr.bf16.gmra.mxu0 %v1423
        %v2180 = vpop.f32.mrf.mxu0
        %v2181 = vadd.f32 0.0, %v2180
        %v2182 = vpop.f32.mrf.mxu0
        %v2183 = vpop.f32.mrf.mxu0
        %v2184 = vadd.f32 0.0, %v2183
        %v2185 = vpop.f32.mrf.mxu0
        %2186 = vmatprep.mubr.bf16.mxu0 0
        %2187 = vmatmul.mubr.bf16.gmra.mxu0 %v1426
        %v2188 = vpop.f32.mrf.mxu0
        %v2189 = vadd.f32 0.0, %v2188
        %v2190 = vpop.f32.mrf.mxu0
        %v2191 = vpop.f32.mrf.mxu0
        %v2192 = vadd.f32 0.0, %v2191
        %v2193 = vpop.f32.mrf.mxu0
        %2194 = vmatprep.mubr.bf16.mxu0 0
        %2195 = vmatmul.mubr.bf16.gmra.mxu0 %v1429
        %v2196 = vpop.f32.mrf.mxu0
        %v2197 = vadd.f32 0.0, %v2196
        %v2198 = vpop.f32.mrf.mxu0
        %v2199 = vpop.f32.mrf.mxu0
        %v2200 = vadd.f32 0.0, %v2199
        %v2201 = vpop.f32.mrf.mxu0
        %2202 = vmatprep.mubr.bf16.mxu0 0
        %2203 = vmatmul.mubr.bf16.gmra.mxu0 %v1432
        %v2204 = vpop.f32.mrf.mxu0
        %v2205 = vadd.f32 0.0, %v2204
        %v2206 = vpop.f32.mrf.mxu0
        %v2207 = vpop.f32.mrf.mxu0
        %v2208 = vadd.f32 0.0, %v2207
        %v2209 = vpop.f32.mrf.mxu0
        %2210 = vmatprep.mubr.bf16.mxu0 0
        %2211 = vmatmul.mubr.bf16.gmra.mxu0 %v1435
        %v2212 = vpop.f32.mrf.mxu0
        %v2213 = vadd.f32 0.0, %v2212
        %v2214 = vpop.f32.mrf.mxu0
        %v2215 = vpop.f32.mrf.mxu0
        %v2216 = vadd.f32 0.0, %v2215
        %v2217 = vpop.f32.mrf.mxu0
        %2218 = vmatprep.mubr.bf16.mxu0 0
        %2219 = vmatmul.mubr.bf16.gmra.mxu0 %v1438
        %v2220 = vpop.f32.mrf.mxu0
        %v2221 = vadd.f32 0.0, %v2220
        %v2222 = vpop.f32.mrf.mxu0
        %v2223 = vpop.f32.mrf.mxu0
        %v2224 = vadd.f32 0.0, %v2223
        %v2225 = vpop.f32.mrf.mxu0
        %2226 = vmatprep.mubr.bf16.mxu0 0
        %2227 = vmatmul.mubr.bf16.gmra.mxu0 %v1441
        %v2228 = vpop.f32.mrf.mxu0
        %v2229 = vadd.f32 0.0, %v2228
        %v2230 = vpop.f32.mrf.mxu0
        %v2231 = vpop.f32.mrf.mxu0
        %v2232 = vadd.f32 0.0, %v2231
        %v2233 = vpop.f32.mrf.mxu0
        %2234 = vmatprep.mubr.bf16.mxu0 0
        %2235 = vmatmul.mubr.bf16.gmra.mxu0 %v1444
        %v2236 = vpop.f32.mrf.mxu0
        %v2237 = vadd.f32 0.0, %v2236
        %v2238 = vpop.f32.mrf.mxu0
        %v2239 = vpop.f32.mrf.mxu0
        %v2240 = vadd.f32 0.0, %v2239
        %v2241 = vpop.f32.mrf.mxu0
        %2242 = vmatprep.mubr.bf16.mxu0 0
        %2243 = vmatmul.mubr.bf16.gmra.mxu0 %v1447
        %v2244 = vpop.f32.mrf.mxu0
        %v2245 = vadd.f32 0.0, %v2244
        %v2246 = vpop.f32.mrf.mxu0
        %v2247 = vpop.f32.mrf.mxu0
        %v2248 = vadd.f32 0.0, %v2247
        %v2249 = vpop.f32.mrf.mxu0
        %2250 = vmatprep.mubr.bf16.mxu0 0
        %2251 = vmatmul.mubr.bf16.gmra.mxu0 %v1450
        %v2252 = vpop.f32.mrf.mxu0
        %v2253 = vadd.f32 0.0, %v2252
        %v2254 = vpop.f32.mrf.mxu0
        %v2255 = vpop.f32.mrf.mxu0
        %v2256 = vadd.f32 0.0, %v2255
        %v2257 = vpop.f32.mrf.mxu0
        %2258 = vmatprep.mubr.bf16.mxu0 0
        %2259 = vmatmul.mubr.bf16.gmra.mxu0 %v2101
        %v2260 = vpop.f32.mrf.mxu0
        %v2261 = vadd.f32 0.0, %v2260
        %v2262 = vpop.f32.mrf.mxu0
        %v2263 = vpop.f32.mrf.mxu0
        %v2264 = vadd.f32 0.0, %v2263
        %v2265 = vpop.f32.mrf.mxu0
        %2266 = vdwg.mxu0
        %v2267 = vadd.f32 %v2052, %v2141
        %v2268 = vadd.f32 %v2053, %v2144
        %v2269 = vadd.f32 %v2054, %v2149
        %v2270 = vadd.f32 %v2055, %v2152
        %v2271 = vadd.f32 %v2056, %v2157
        %v2272 = vadd.f32 %v2057, %v2160
        %v2273 = vadd.f32 %v2058, %v2165
        %v2274 = vadd.f32 %v2059, %v2168
        %v2275 = vadd.f32 %v2060, %v2173
        %v2276 = vadd.f32 %v2061, %v2176
        %v2277 = vadd.f32 %v2062, %v2181
        %v2278 = vadd.f32 %v2063, %v2184
        %v2279 = vadd.f32 %v2064, %v2189
        %v2280 = vadd.f32 %v2065, %v2192
        %v2281 = vadd.f32 %v2066, %v2197
        %v2282 = vadd.f32 %v2067, %v2200
        %v2283 = vadd.f32 %v2068, %v2205
        %v2284 = vadd.f32 %v2069, %v2208
        %v2285 = vadd.f32 %v2070, %v2213
        %v2286 = vadd.f32 %v2071, %v2216
        %v2287 = vadd.f32 %v2072, %v2221
        %v2288 = vadd.f32 %v2073, %v2224
        %v2289 = vadd.f32 %v2074, %v2229
        %v2290 = vadd.f32 %v2075, %v2232
        %v2291 = vadd.f32 %v2076, %v2237
        %v2292 = vadd.f32 %v2077, %v2240
        %v2293 = vadd.f32 %v2078, %v2245
        %v2294 = vadd.f32 %v2079, %v2248
        %v2295 = vadd.f32 %v2080, %v2253
        %v2296 = vadd.f32 %v2081, %v2256
        %v2297 = vadd.f32 %v2082, %v2261
        %v2298 = vadd.f32 %v2083, %v2264
        %v2299 = vld [vmem:[%s1 + $0xc] sm:$0x3]
        %v2302 = vunpack.c.l.b16 %v274
        %v2303 = vunpack.c.l.b16 %v275
        %v2304 = vpack.c.b16 %v2303, %v2302
        %v2306 = vsel %vm718, %v2304, 0
        %v2309 = vsel %vm767, %v2299, 0
        %2311 = vmatprep.subr.bf16.mxu0 0
        %2312 = vmatpush1.bf16.msra.mxu0 0
        %2313 = vmatprep.subr.bf16.mxu0 0
        %2314 = vmatpush1.bf16.msra.mxu0 0
        %2315 = vmatprep.subr.bf16.mxu0 0
        %2316 = vmatpush1.bf16.msra.mxu0 0
        %2317 = vmatprep.subr.bf16.mxu0 0
        %2318 = vmatpush1.bf16.msra.mxu0 0
        %2319 = vmatprep.subr.bf16.mxu0 0
        %2320 = vmatpush1.bf16.msra.mxu0 0
        %2321 = vmatprep.subr.bf16.mxu0 0
        %2322 = vmatpush1.bf16.msra.mxu0 0
        %2323 = vmatprep.subr.bf16.mxu0 0
        %2324 = vmatpush1.bf16.msra.mxu0 0
        %2325 = vmatprep.subr.bf16.mxu0 0
        %2326 = vmatpush1.bf16.msra.mxu0 %v2309
        %2327 = vmatprep.subr.bf16.mxu0 0
        %2328 = vmatpush2.bf16.msra.mxu0 0
        %2329 = vmatprep.subr.bf16.mxu0 0
        %2330 = vmatpush2.bf16.msra.mxu0 0
        %2331 = vmatprep.subr.bf16.mxu0 0
        %2332 = vmatpush2.bf16.msra.mxu0 0
        %2333 = vmatprep.subr.bf16.mxu0 0
        %2334 = vmatpush2.bf16.msra.mxu0 0
        %2335 = vmatprep.subr.bf16.mxu0 0
        %2336 = vmatpush2.bf16.msra.mxu0 0
        %2337 = vmatprep.subr.bf16.mxu0 0
        %2338 = vmatpush2.bf16.msra.mxu0 0
        %2339 = vmatprep.subr.bf16.mxu0 0
        %2340 = vmatpush2.bf16.msra.mxu0 0
        %2341 = vmatprep.subr.bf16.mxu0 0
        %2342 = vmatpush2.bf16.msra.mxu0 0
        %2343 = vmatprep.mubr.bf16.mxu0 0
        %2344 = vmatmul.mubr.bf16.gmra.mxu0 %v1019
        %v2345 = vpop.f32.mrf.mxu0
        %v2346 = vadd.f32 0.0, %v2345
        %v2347 = vpop.f32.mrf.mxu0
        %v2348 = vpop.f32.mrf.mxu0
        %v2349 = vadd.f32 0.0, %v2348
        %v2350 = vpop.f32.mrf.mxu0
        %2351 = vmatprep.mubr.bf16.mxu0 0
        %2352 = vmatmul.mubr.bf16.gmra.mxu0 %v1022
        %v2353 = vpop.f32.mrf.mxu0
        %v2354 = vadd.f32 0.0, %v2353
        %v2355 = vpop.f32.mrf.mxu0
        %v2356 = vpop.f32.mrf.mxu0
        %v2357 = vadd.f32 0.0, %v2356
        %v2358 = vpop.f32.mrf.mxu0
        %2359 = vmatprep.mubr.bf16.mxu0 0
        %2360 = vmatmul.mubr.bf16.gmra.mxu0 %v1025
        %v2361 = vpop.f32.mrf.mxu0
        %v2362 = vadd.f32 0.0, %v2361
        %v2363 = vpop.f32.mrf.mxu0
        %v2364 = vpop.f32.mrf.mxu0
        %v2365 = vadd.f32 0.0, %v2364
        %v2366 = vpop.f32.mrf.mxu0
        %2367 = vmatprep.mubr.bf16.mxu0 0
        %2368 = vmatmul.mubr.bf16.gmra.mxu0 %v1028
        %v2369 = vpop.f32.mrf.mxu0
        %v2370 = vadd.f32 0.0, %v2369
        %v2371 = vpop.f32.mrf.mxu0
        %v2372 = vpop.f32.mrf.mxu0
        %v2373 = vadd.f32 0.0, %v2372
        %v2374 = vpop.f32.mrf.mxu0
        %2375 = vmatprep.mubr.bf16.mxu0 0
        %2376 = vmatmul.mubr.bf16.gmra.mxu0 %v1031
        %v2377 = vpop.f32.mrf.mxu0
        %v2378 = vadd.f32 0.0, %v2377
        %v2379 = vpop.f32.mrf.mxu0
        %v2380 = vpop.f32.mrf.mxu0
        %v2381 = vadd.f32 0.0, %v2380
        %v2382 = vpop.f32.mrf.mxu0
        %2383 = vmatprep.mubr.bf16.mxu0 0
        %2384 = vmatmul.mubr.bf16.gmra.mxu0 %v1034
        %v2385 = vpop.f32.mrf.mxu0
        %v2386 = vadd.f32 0.0, %v2385
        %v2387 = vpop.f32.mrf.mxu0
        %v2388 = vpop.f32.mrf.mxu0
        %v2389 = vadd.f32 0.0, %v2388
        %v2390 = vpop.f32.mrf.mxu0
        %2391 = vmatprep.mubr.bf16.mxu0 0
        %2392 = vmatmul.mubr.bf16.gmra.mxu0 %v1037
        %v2393 = vpop.f32.mrf.mxu0
        %v2394 = vadd.f32 0.0, %v2393
        %v2395 = vpop.f32.mrf.mxu0
        %v2396 = vpop.f32.mrf.mxu0
        %v2397 = vadd.f32 0.0, %v2396
        %v2398 = vpop.f32.mrf.mxu0
        %2399 = vmatprep.mubr.bf16.mxu0 0
        %2400 = vmatmul.mubr.bf16.gmra.mxu0 %v1040
        %v2401 = vpop.f32.mrf.mxu0
        %v2402 = vadd.f32 0.0, %v2401
        %v2403 = vpop.f32.mrf.mxu0
        %v2404 = vpop.f32.mrf.mxu0
        %v2405 = vadd.f32 0.0, %v2404
        %v2406 = vpop.f32.mrf.mxu0
        %2407 = vmatprep.mubr.bf16.mxu0 0
        %2408 = vmatmul.mubr.bf16.gmra.mxu0 %v1043
        %v2409 = vpop.f32.mrf.mxu0
        %v2410 = vadd.f32 0.0, %v2409
        %v2411 = vpop.f32.mrf.mxu0
        %v2412 = vpop.f32.mrf.mxu0
        %v2413 = vadd.f32 0.0, %v2412
        %v2414 = vpop.f32.mrf.mxu0
        %2415 = vmatprep.mubr.bf16.mxu0 0
        %2416 = vmatmul.mubr.bf16.gmra.mxu0 %v1046
        %v2417 = vpop.f32.mrf.mxu0
        %v2418 = vadd.f32 0.0, %v2417
        %v2419 = vpop.f32.mrf.mxu0
        %v2420 = vpop.f32.mrf.mxu0
        %v2421 = vadd.f32 0.0, %v2420
        %v2422 = vpop.f32.mrf.mxu0
        %2423 = vmatprep.mubr.bf16.mxu0 0
        %2424 = vmatmul.mubr.bf16.gmra.mxu0 %v1049
        %v2425 = vpop.f32.mrf.mxu0
        %v2426 = vadd.f32 0.0, %v2425
        %v2427 = vpop.f32.mrf.mxu0
        %v2428 = vpop.f32.mrf.mxu0
        %v2429 = vadd.f32 0.0, %v2428
        %v2430 = vpop.f32.mrf.mxu0
        %2431 = vmatprep.mubr.bf16.mxu0 0
        %2432 = vmatmul.mubr.bf16.gmra.mxu0 %v1052
        %v2433 = vpop.f32.mrf.mxu0
        %v2434 = vadd.f32 0.0, %v2433
        %v2435 = vpop.f32.mrf.mxu0
        %v2436 = vpop.f32.mrf.mxu0
        %v2437 = vadd.f32 0.0, %v2436
        %v2438 = vpop.f32.mrf.mxu0
        %2439 = vmatprep.mubr.bf16.mxu0 0
        %2440 = vmatmul.mubr.bf16.gmra.mxu0 %v1055
        %v2441 = vpop.f32.mrf.mxu0
        %v2442 = vadd.f32 0.0, %v2441
        %v2443 = vpop.f32.mrf.mxu0
        %v2444 = vpop.f32.mrf.mxu0
        %v2445 = vadd.f32 0.0, %v2444
        %v2446 = vpop.f32.mrf.mxu0
        %2447 = vmatprep.mubr.bf16.mxu0 0
        %2448 = vmatmul.mubr.bf16.gmra.mxu0 %v1058
        %v2449 = vpop.f32.mrf.mxu0
        %v2450 = vadd.f32 0.0, %v2449
        %v2451 = vpop.f32.mrf.mxu0
        %v2452 = vpop.f32.mrf.mxu0
        %v2453 = vadd.f32 0.0, %v2452
        %v2454 = vpop.f32.mrf.mxu0
        %2455 = vmatprep.mubr.bf16.mxu0 0
        %2456 = vmatmul.mubr.bf16.gmra.mxu0 %v1659
        %v2457 = vpop.f32.mrf.mxu0
        %v2458 = vadd.f32 0.0, %v2457
        %v2459 = vpop.f32.mrf.mxu0
        %v2460 = vpop.f32.mrf.mxu0
        %v2461 = vadd.f32 0.0, %v2460
        %v2462 = vpop.f32.mrf.mxu0
        %2463 = vmatprep.mubr.bf16.mxu0 0
        %2464 = vmatmul.mubr.bf16.gmra.mxu0 %v2306
        %v2465 = vpop.f32.mrf.mxu0
        %v2466 = vadd.f32 0.0, %v2465
        %v2467 = vpop.f32.mrf.mxu0
        %v2468 = vpop.f32.mrf.mxu0
        %v2469 = vadd.f32 0.0, %v2468
        %v2470 = vpop.f32.mrf.mxu0
        %2471 = vdwg.mxu0
        %v2472 = vadd.f32 %v2267, %v2346
        %v2473 = vadd.f32 %v2268, %v2349
        %v2474 = vadd.f32 %v2269, %v2354
        %v2475 = vadd.f32 %v2270, %v2357
        %v2476 = vadd.f32 %v2271, %v2362
        %v2477 = vadd.f32 %v2272, %v2365
        %v2478 = vadd.f32 %v2273, %v2370
        %v2479 = vadd.f32 %v2274, %v2373
        %v2480 = vadd.f32 %v2275, %v2378
        %v2481 = vadd.f32 %v2276, %v2381
        %v2482 = vadd.f32 %v2277, %v2386
        %v2483 = vadd.f32 %v2278, %v2389
        %v2484 = vadd.f32 %v2279, %v2394
        %v2485 = vadd.f32 %v2280, %v2397
        %v2486 = vadd.f32 %v2281, %v2402
        %v2487 = vadd.f32 %v2282, %v2405
        %v2488 = vadd.f32 %v2283, %v2410
        %v2489 = vadd.f32 %v2284, %v2413
        %v2490 = vadd.f32 %v2285, %v2418
        %v2491 = vadd.f32 %v2286, %v2421
        %v2492 = vadd.f32 %v2287, %v2426
        %v2493 = vadd.f32 %v2288, %v2429
        %v2494 = vadd.f32 %v2289, %v2434
        %v2495 = vadd.f32 %v2290, %v2437
        %v2496 = vadd.f32 %v2291, %v2442
        %v2497 = vadd.f32 %v2292, %v2445
        %v2498 = vadd.f32 %v2293, %v2450
        %v2499 = vadd.f32 %v2294, %v2453
        %v2500 = vadd.f32 %v2295, %v2458
        %v2501 = vadd.f32 %v2296, %v2461
        %v2502 = vadd.f32 %v2297, %v2466
        %v2503 = vadd.f32 %v2298, %v2469
        %v2505 = vshrl.u32 %v274, 16
        %v2507 = vrot.slane %v2505, 4
        %v2508 = vshll.u32 %v274, 16
        %v2510 = vrot.slane %v2508, 5
        %v2511 = vor.u32 %v2507, %v2510
        %v2512 = vrot.slane %v2511, 4
        %v2514 = vshll.u32 %v275, 16
        %v2516 = vrot.slane %v2514, 5
        %v2517 = vsel %vm280, %v2512, %v2516
        %v2518 = vshrl.u32 %v275, 16
        %v2520 = vrot.slane %v2518, 4
        %v2521 = vor.u32 %v2520, %v2516
        %v2522 = vrot.slane %v2521, 4
        %v2524 = vshll.u32 %v276, 16
        %v2526 = vrot.slane %v2524, 5
        %v2527 = vsel %vm280, %v2522, %v2526
        %v2528 = vld [vmem:[%s1 + $0xc] sm:$0xc]
        %v2529 = vunpack.c.l.b16 %v2517
        %v2530 = vunpack.c.l.b16 %v2527
        %v2531 = vpack.c.b16 %v2530, %v2529
        %v2533 = vunpack.c.l.b16 %v2528
        %v2534 = vpack.c.b16 %v2533, %v2533
        %v2535 = vrot.slane %v2534, 2
        %v2537 = vsel %vm718, %v2531, 0
        %v2540 = vsel %vm767, %v2535, 0
        %2542 = vmatprep.subr.bf16.mxu0 0
        %2543 = vmatpush1.bf16.msra.mxu0 0
        %2544 = vmatprep.subr.bf16.mxu0 0
        %2545 = vmatpush1.bf16.msra.mxu0 0
        %2546 = vmatprep.subr.bf16.mxu0 0
        %2547 = vmatpush1.bf16.msra.mxu0 0
        %2548 = vmatprep.subr.bf16.mxu0 0
        %2549 = vmatpush1.bf16.msra.mxu0 0
        %2550 = vmatprep.subr.bf16.mxu0 0
        %2551 = vmatpush1.bf16.msra.mxu0 0
        %2552 = vmatprep.subr.bf16.mxu0 0
        %2553 = vmatpush1.bf16.msra.mxu0 0
        %2554 = vmatprep.subr.bf16.mxu0 0
        %2555 = vmatpush1.bf16.msra.mxu0 0
        %2556 = vmatprep.subr.bf16.mxu0 0
        %2557 = vmatpush1.bf16.msra.mxu0 %v2540
        %2558 = vmatprep.subr.bf16.mxu0 0
        %2559 = vmatpush2.bf16.msra.mxu0 0
        %2560 = vmatprep.subr.bf16.mxu0 0
        %2561 = vmatpush2.bf16.msra.mxu0 0
        %2562 = vmatprep.subr.bf16.mxu0 0
        %2563 = vmatpush2.bf16.msra.mxu0 0
        %2564 = vmatprep.subr.bf16.mxu0 0
        %2565 = vmatpush2.bf16.msra.mxu0 0
        %2566 = vmatprep.subr.bf16.mxu0 0
        %2567 = vmatpush2.bf16.msra.mxu0 0
        %2568 = vmatprep.subr.bf16.mxu0 0
        %2569 = vmatpush2.bf16.msra.mxu0 0
        %2570 = vmatprep.subr.bf16.mxu0 0
        %2571 = vmatpush2.bf16.msra.mxu0 0
        %2572 = vmatprep.subr.bf16.mxu0 0
        %2573 = vmatpush2.bf16.msra.mxu0 0
        %2574 = vmatprep.mubr.bf16.mxu0 0
        %2575 = vmatmul.mubr.bf16.gmra.mxu0 %v726
        %v2576 = vpop.f32.mrf.mxu0
        %v2577 = vadd.f32 0.0, %v2576
        %v2578 = vpop.f32.mrf.mxu0
        %v2579 = vpop.f32.mrf.mxu0
        %v2580 = vadd.f32 0.0, %v2579
        %v2581 = vpop.f32.mrf.mxu0
        %2582 = vmatprep.mubr.bf16.mxu0 0
        %2583 = vmatmul.mubr.bf16.gmra.mxu0 %v729
        %v2584 = vpop.f32.mrf.mxu0
        %v2585 = vadd.f32 0.0, %v2584
        %v2586 = vpop.f32.mrf.mxu0
        %v2587 = vpop.f32.mrf.mxu0
        %v2588 = vadd.f32 0.0, %v2587
        %v2589 = vpop.f32.mrf.mxu0
        %2590 = vmatprep.mubr.bf16.mxu0 0
        %2591 = vmatmul.mubr.bf16.gmra.mxu0 %v732
        %v2592 = vpop.f32.mrf.mxu0
        %v2593 = vadd.f32 0.0, %v2592
        %v2594 = vpop.f32.mrf.mxu0
        %v2595 = vpop.f32.mrf.mxu0
        %v2596 = vadd.f32 0.0, %v2595
        %v2597 = vpop.f32.mrf.mxu0
        %2598 = vmatprep.mubr.bf16.mxu0 0
        %2599 = vmatmul.mubr.bf16.gmra.mxu0 %v735
        %v2600 = vpop.f32.mrf.mxu0
        %v2601 = vadd.f32 0.0, %v2600
        %v2602 = vpop.f32.mrf.mxu0
        %v2603 = vpop.f32.mrf.mxu0
        %v2604 = vadd.f32 0.0, %v2603
        %v2605 = vpop.f32.mrf.mxu0
        %2606 = vmatprep.mubr.bf16.mxu0 0
        %2607 = vmatmul.mubr.bf16.gmra.mxu0 %v738
        %v2608 = vpop.f32.mrf.mxu0
        %v2609 = vadd.f32 0.0, %v2608
        %v2610 = vpop.f32.mrf.mxu0
        %v2611 = vpop.f32.mrf.mxu0
        %v2612 = vadd.f32 0.0, %v2611
        %v2613 = vpop.f32.mrf.mxu0
        %2614 = vmatprep.mubr.bf16.mxu0 0
        %2615 = vmatmul.mubr.bf16.gmra.mxu0 %v741
        %v2616 = vpop.f32.mrf.mxu0
        %v2617 = vadd.f32 0.0, %v2616
        %v2618 = vpop.f32.mrf.mxu0
        %v2619 = vpop.f32.mrf.mxu0
        %v2620 = vadd.f32 0.0, %v2619
        %v2621 = vpop.f32.mrf.mxu0
        %2622 = vmatprep.mubr.bf16.mxu0 0
        %2623 = vmatmul.mubr.bf16.gmra.mxu0 %v744
        %v2624 = vpop.f32.mrf.mxu0
        %v2625 = vadd.f32 0.0, %v2624
        %v2626 = vpop.f32.mrf.mxu0
        %v2627 = vpop.f32.mrf.mxu0
        %v2628 = vadd.f32 0.0, %v2627
        %v2629 = vpop.f32.mrf.mxu0
        %2630 = vmatprep.mubr.bf16.mxu0 0
        %2631 = vmatmul.mubr.bf16.gmra.mxu0 %v747
        %v2632 = vpop.f32.mrf.mxu0
        %v2633 = vadd.f32 0.0, %v2632
        %v2634 = vpop.f32.mrf.mxu0
        %v2635 = vpop.f32.mrf.mxu0
        %v2636 = vadd.f32 0.0, %v2635
        %v2637 = vpop.f32.mrf.mxu0
        %2638 = vmatprep.mubr.bf16.mxu0 0
        %2639 = vmatmul.mubr.bf16.gmra.mxu0 %v750
        %v2640 = vpop.f32.mrf.mxu0
        %v2641 = vadd.f32 0.0, %v2640
        %v2642 = vpop.f32.mrf.mxu0
        %v2643 = vpop.f32.mrf.mxu0
        %v2644 = vadd.f32 0.0, %v2643
        %v2645 = vpop.f32.mrf.mxu0
        %2646 = vmatprep.mubr.bf16.mxu0 0
        %2647 = vmatmul.mubr.bf16.gmra.mxu0 %v753
        %v2648 = vpop.f32.mrf.mxu0
        %v2649 = vadd.f32 0.0, %v2648
        %v2650 = vpop.f32.mrf.mxu0
        %v2651 = vpop.f32.mrf.mxu0
        %v2652 = vadd.f32 0.0, %v2651
        %v2653 = vpop.f32.mrf.mxu0
        %2654 = vmatprep.mubr.bf16.mxu0 0
        %2655 = vmatmul.mubr.bf16.gmra.mxu0 %v756
        %v2656 = vpop.f32.mrf.mxu0
        %v2657 = vadd.f32 0.0, %v2656
        %v2658 = vpop.f32.mrf.mxu0
        %v2659 = vpop.f32.mrf.mxu0
        %v2660 = vadd.f32 0.0, %v2659
        %v2661 = vpop.f32.mrf.mxu0
        %2662 = vmatprep.mubr.bf16.mxu0 0
        %2663 = vmatmul.mubr.bf16.gmra.mxu0 %v759
        %v2664 = vpop.f32.mrf.mxu0
        %v2665 = vadd.f32 0.0, %v2664
        %v2666 = vpop.f32.mrf.mxu0
        %v2667 = vpop.f32.mrf.mxu0
        %v2668 = vadd.f32 0.0, %v2667
        %v2669 = vpop.f32.mrf.mxu0
        %2670 = vmatprep.mubr.bf16.mxu0 0
        %2671 = vmatmul.mubr.bf16.gmra.mxu0 %v762
        %v2672 = vpop.f32.mrf.mxu0
        %v2673 = vadd.f32 0.0, %v2672
        %v2674 = vpop.f32.mrf.mxu0
        %v2675 = vpop.f32.mrf.mxu0
        %v2676 = vadd.f32 0.0, %v2675
        %v2677 = vpop.f32.mrf.mxu0
        %2678 = vmatprep.mubr.bf16.mxu0 0
        %2679 = vmatmul.mubr.bf16.gmra.mxu0 %v765
        %v2680 = vpop.f32.mrf.mxu0
        %v2681 = vadd.f32 0.0, %v2680
        %v2682 = vpop.f32.mrf.mxu0
        %v2683 = vpop.f32.mrf.mxu0
        %v2684 = vadd.f32 0.0, %v2683
        %v2685 = vpop.f32.mrf.mxu0
        %2686 = vmatprep.mubr.bf16.mxu0 0
        %2687 = vmatmul.mubr.bf16.gmra.mxu0 %v1886
        %v2688 = vpop.f32.mrf.mxu0
        %v2689 = vadd.f32 0.0, %v2688
        %v2690 = vpop.f32.mrf.mxu0
        %v2691 = vpop.f32.mrf.mxu0
        %v2692 = vadd.f32 0.0, %v2691
        %v2693 = vpop.f32.mrf.mxu0
        %2694 = vmatprep.mubr.bf16.mxu0 0
        %2695 = vmatmul.mubr.bf16.gmra.mxu0 %v2537
        %v2696 = vpop.f32.mrf.mxu0
        %v2697 = vadd.f32 0.0, %v2696
        %v2698 = vpop.f32.mrf.mxu0
        %v2699 = vpop.f32.mrf.mxu0
        %v2700 = vadd.f32 0.0, %v2699
        %v2701 = vpop.f32.mrf.mxu0
        %2702 = vdwg.mxu0
        %v2703 = vadd.f32 %v2472, %v2577
        %v2704 = vadd.f32 %v2473, %v2580
        %v2705 = vadd.f32 %v2474, %v2585
        %v2706 = vadd.f32 %v2475, %v2588
        %v2707 = vadd.f32 %v2476, %v2593
        %v2708 = vadd.f32 %v2477, %v2596
        %v2709 = vadd.f32 %v2478, %v2601
        %v2710 = vadd.f32 %v2479, %v2604
        %v2711 = vadd.f32 %v2480, %v2609
        %v2712 = vadd.f32 %v2481, %v2612
        %v2713 = vadd.f32 %v2482, %v2617
        %v2714 = vadd.f32 %v2483, %v2620
        %v2715 = vadd.f32 %v2484, %v2625
        %v2716 = vadd.f32 %v2485, %v2628
        %v2717 = vadd.f32 %v2486, %v2633
        %v2718 = vadd.f32 %v2487, %v2636
        %v2719 = vadd.f32 %v2488, %v2641
        %v2720 = vadd.f32 %v2489, %v2644
        %v2721 = vadd.f32 %v2490, %v2649
        %v2722 = vadd.f32 %v2491, %v2652
        %v2723 = vadd.f32 %v2492, %v2657
        %v2724 = vadd.f32 %v2493, %v2660
        %v2725 = vadd.f32 %v2494, %v2665
        %v2726 = vadd.f32 %v2495, %v2668
        %v2727 = vadd.f32 %v2496, %v2673
        %v2728 = vadd.f32 %v2497, %v2676
        %v2729 = vadd.f32 %v2498, %v2681
        %v2730 = vadd.f32 %v2499, %v2684
        %v2731 = vadd.f32 %v2500, %v2689
        %v2732 = vadd.f32 %v2501, %v2692
        %v2733 = vadd.f32 %v2502, %v2697
        %v2734 = vadd.f32 %v2503, %v2700
        %v2736 = vrot.slane %v274, 5
        %v2737 = vrot.slane %v2736, 4
        %v2738 = vrot.slane %v275, 5
        %v2739 = vsel %vm1242, %v2737, %v2738
        %v2740 = vrot.slane %v2738, 4
        %v2741 = vrot.slane %v276, 5
        %v2742 = vsel %vm1242, %v2740, %v2741
        %v2743 = vld [vmem:[%s1 + $0x10] sm:$0x3]
        %v2744 = vunpack.c.l.b16 %v2739
        %v2745 = vunpack.c.l.b16 %v2742
        %v2746 = vpack.c.b16 %v2745, %v2744
        %v2748 = vsel %vm718, %v2746, 0
        %v2751 = vsel %vm767, %v2743, 0
        %2753 = vmatprep.subr.bf16.mxu0 0
        %2754 = vmatpush1.bf16.msra.mxu0 0
        %2755 = vmatprep.subr.bf16.mxu0 0
        %2756 = vmatpush1.bf16.msra.mxu0 0
        %2757 = vmatprep.subr.bf16.mxu0 0
        %2758 = vmatpush1.bf16.msra.mxu0 0
        %2759 = vmatprep.subr.bf16.mxu0 0
        %2760 = vmatpush1.bf16.msra.mxu0 0
        %2761 = vmatprep.subr.bf16.mxu0 0
        %2762 = vmatpush1.bf16.msra.mxu0 0
        %2763 = vmatprep.subr.bf16.mxu0 0
        %2764 = vmatpush1.bf16.msra.mxu0 0
        %2765 = vmatprep.subr.bf16.mxu0 0
        %2766 = vmatpush1.bf16.msra.mxu0 0
        %2767 = vmatprep.subr.bf16.mxu0 0
        %2768 = vmatpush1.bf16.msra.mxu0 %v2751
        %2769 = vmatprep.subr.bf16.mxu0 0
        %2770 = vmatpush2.bf16.msra.mxu0 0
        %2771 = vmatprep.subr.bf16.mxu0 0
        %2772 = vmatpush2.bf16.msra.mxu0 0
        %2773 = vmatprep.subr.bf16.mxu0 0
        %2774 = vmatpush2.bf16.msra.mxu0 0
        %2775 = vmatprep.subr.bf16.mxu0 0
        %2776 = vmatpush2.bf16.msra.mxu0 0
        %2777 = vmatprep.subr.bf16.mxu0 0
        %2778 = vmatpush2.bf16.msra.mxu0 0
        %2779 = vmatprep.subr.bf16.mxu0 0
        %2780 = vmatpush2.bf16.msra.mxu0 0
        %2781 = vmatprep.subr.bf16.mxu0 0
        %2782 = vmatpush2.bf16.msra.mxu0 0
        %2783 = vmatprep.subr.bf16.mxu0 0
        %2784 = vmatpush2.bf16.msra.mxu0 0
        %2785 = vmatprep.mubr.bf16.mxu0 0
        %2786 = vmatmul.mubr.bf16.gmra.mxu0 %v1411
        %v2787 = vpop.f32.mrf.mxu0
        %v2788 = vadd.f32 0.0, %v2787
        %v2789 = vpop.f32.mrf.mxu0
        %v2790 = vpop.f32.mrf.mxu0
        %v2791 = vadd.f32 0.0, %v2790
        %v2792 = vpop.f32.mrf.mxu0
        %2793 = vmatprep.mubr.bf16.mxu0 0
        %2794 = vmatmul.mubr.bf16.gmra.mxu0 %v1414
        %v2795 = vpop.f32.mrf.mxu0
        %v2796 = vadd.f32 0.0, %v2795
        %v2797 = vpop.f32.mrf.mxu0
        %v2798 = vpop.f32.mrf.mxu0
        %v2799 = vadd.f32 0.0, %v2798
        %v2800 = vpop.f32.mrf.mxu0
        %2801 = vmatprep.mubr.bf16.mxu0 0
        %2802 = vmatmul.mubr.bf16.gmra.mxu0 %v1417
        %v2803 = vpop.f32.mrf.mxu0
        %v2804 = vadd.f32 0.0, %v2803
        %v2805 = vpop.f32.mrf.mxu0
        %v2806 = vpop.f32.mrf.mxu0
        %v2807 = vadd.f32 0.0, %v2806
        %v2808 = vpop.f32.mrf.mxu0
        %2809 = vmatprep.mubr.bf16.mxu0 0
        %2810 = vmatmul.mubr.bf16.gmra.mxu0 %v1420
        %v2811 = vpop.f32.mrf.mxu0
        %v2812 = vadd.f32 0.0, %v2811
        %v2813 = vpop.f32.mrf.mxu0
        %v2814 = vpop.f32.mrf.mxu0
        %v2815 = vadd.f32 0.0, %v2814
        %v2816 = vpop.f32.mrf.mxu0
        %2817 = vmatprep.mubr.bf16.mxu0 0
        %2818 = vmatmul.mubr.bf16.gmra.mxu0 %v1423
        %v2819 = vpop.f32.mrf.mxu0
        %v2820 = vadd.f32 0.0, %v2819
        %v2821 = vpop.f32.mrf.mxu0
        %v2822 = vpop.f32.mrf.mxu0
        %v2823 = vadd.f32 0.0, %v2822
        %v2824 = vpop.f32.mrf.mxu0
        %2825 = vmatprep.mubr.bf16.mxu0 0
        %2826 = vmatmul.mubr.bf16.gmra.mxu0 %v1426
        %v2827 = vpop.f32.mrf.mxu0
        %v2828 = vadd.f32 0.0, %v2827
        %v2829 = vpop.f32.mrf.mxu0
        %v2830 = vpop.f32.mrf.mxu0
        %v2831 = vadd.f32 0.0, %v2830
        %v2832 = vpop.f32.mrf.mxu0
        %2833 = vmatprep.mubr.bf16.mxu0 0
        %2834 = vmatmul.mubr.bf16.gmra.mxu0 %v1429
        %v2835 = vpop.f32.mrf.mxu0
        %v2836 = vadd.f32 0.0, %v2835
        %v2837 = vpop.f32.mrf.mxu0
        %v2838 = vpop.f32.mrf.mxu0
        %v2839 = vadd.f32 0.0, %v2838
        %v2840 = vpop.f32.mrf.mxu0
        %2841 = vmatprep.mubr.bf16.mxu0 0
        %2842 = vmatmul.mubr.bf16.gmra.mxu0 %v1432
        %v2843 = vpop.f32.mrf.mxu0
        %v2844 = vadd.f32 0.0, %v2843
        %v2845 = vpop.f32.mrf.mxu0
        %v2846 = vpop.f32.mrf.mxu0
        %v2847 = vadd.f32 0.0, %v2846
        %v2848 = vpop.f32.mrf.mxu0
        %2849 = vmatprep.mubr.bf16.mxu0 0
        %2850 = vmatmul.mubr.bf16.gmra.mxu0 %v1435
        %v2851 = vpop.f32.mrf.mxu0
        %v2852 = vadd.f32 0.0, %v2851
        %v2853 = vpop.f32.mrf.mxu0
        %v2854 = vpop.f32.mrf.mxu0
        %v2855 = vadd.f32 0.0, %v2854
        %v2856 = vpop.f32.mrf.mxu0
        %2857 = vmatprep.mubr.bf16.mxu0 0
        %2858 = vmatmul.mubr.bf16.gmra.mxu0 %v1438
        %v2859 = vpop.f32.mrf.mxu0
        %v2860 = vadd.f32 0.0, %v2859
        %v2861 = vpop.f32.mrf.mxu0
        %v2862 = vpop.f32.mrf.mxu0
        %v2863 = vadd.f32 0.0, %v2862
        %v2864 = vpop.f32.mrf.mxu0
        %2865 = vmatprep.mubr.bf16.mxu0 0
        %2866 = vmatmul.mubr.bf16.gmra.mxu0 %v1441
        %v2867 = vpop.f32.mrf.mxu0
        %v2868 = vadd.f32 0.0, %v2867
        %v2869 = vpop.f32.mrf.mxu0
        %v2870 = vpop.f32.mrf.mxu0
        %v2871 = vadd.f32 0.0, %v2870
        %v2872 = vpop.f32.mrf.mxu0
        %2873 = vmatprep.mubr.bf16.mxu0 0
        %2874 = vmatmul.mubr.bf16.gmra.mxu0 %v1444
        %v2875 = vpop.f32.mrf.mxu0
        %v2876 = vadd.f32 0.0, %v2875
        %v2877 = vpop.f32.mrf.mxu0
        %v2878 = vpop.f32.mrf.mxu0
        %v2879 = vadd.f32 0.0, %v2878
        %v2880 = vpop.f32.mrf.mxu0
        %2881 = vmatprep.mubr.bf16.mxu0 0
        %2882 = vmatmul.mubr.bf16.gmra.mxu0 %v1447
        %v2883 = vpop.f32.mrf.mxu0
        %v2884 = vadd.f32 0.0, %v2883
        %v2885 = vpop.f32.mrf.mxu0
        %v2886 = vpop.f32.mrf.mxu0
        %v2887 = vadd.f32 0.0, %v2886
        %v2888 = vpop.f32.mrf.mxu0
        %2889 = vmatprep.mubr.bf16.mxu0 0
        %2890 = vmatmul.mubr.bf16.gmra.mxu0 %v1450
        %v2891 = vpop.f32.mrf.mxu0
        %v2892 = vadd.f32 0.0, %v2891
        %v2893 = vpop.f32.mrf.mxu0
        %v2894 = vpop.f32.mrf.mxu0
        %v2895 = vadd.f32 0.0, %v2894
        %v2896 = vpop.f32.mrf.mxu0
        %2897 = vmatprep.mubr.bf16.mxu0 0
        %2898 = vmatmul.mubr.bf16.gmra.mxu0 %v2101
        %v2899 = vpop.f32.mrf.mxu0
        %v2900 = vadd.f32 0.0, %v2899
        %v2901 = vpop.f32.mrf.mxu0
        %v2902 = vpop.f32.mrf.mxu0
        %v2903 = vadd.f32 0.0, %v2902
        %v2904 = vpop.f32.mrf.mxu0
        %2905 = vmatprep.mubr.bf16.mxu0 0
        %2906 = vmatmul.mubr.bf16.gmra.mxu0 %v2748
        %v2907 = vpop.f32.mrf.mxu0
        %v2908 = vadd.f32 0.0, %v2907
        %v2909 = vpop.f32.mrf.mxu0
        %v2910 = vpop.f32.mrf.mxu0
        %v2911 = vadd.f32 0.0, %v2910
        %v2912 = vpop.f32.mrf.mxu0
        %2913 = vdwg.mxu0
        %v2914 = vadd.f32 %v2703, %v2788
        %v2915 = vadd.f32 %v2704, %v2791
        %v2916 = vadd.f32 %v2705, %v2796
        %v2917 = vadd.f32 %v2706, %v2799
        %v2918 = vadd.f32 %v2707, %v2804
        %v2919 = vadd.f32 %v2708, %v2807
        %v2920 = vadd.f32 %v2709, %v2812
        %v2921 = vadd.f32 %v2710, %v2815
        %v2922 = vadd.f32 %v2711, %v2820
        %v2923 = vadd.f32 %v2712, %v2823
        %v2924 = vadd.f32 %v2713, %v2828
        %v2925 = vadd.f32 %v2714, %v2831
        %v2926 = vadd.f32 %v2715, %v2836
        %v2927 = vadd.f32 %v2716, %v2839
        %v2928 = vadd.f32 %v2717, %v2844
        %v2929 = vadd.f32 %v2718, %v2847
        %v2930 = vadd.f32 %v2719, %v2852
        %v2931 = vadd.f32 %v2720, %v2855
        %v2932 = vadd.f32 %v2721, %v2860
        %v2933 = vadd.f32 %v2722, %v2863
        %v2934 = vadd.f32 %v2723, %v2868
        %v2935 = vadd.f32 %v2724, %v2871
        %v2936 = vadd.f32 %v2725, %v2876
        %v2937 = vadd.f32 %v2726, %v2879
        %v2938 = vadd.f32 %v2727, %v2884
        %v2939 = vadd.f32 %v2728, %v2887
        %v2940 = vadd.f32 %v2729, %v2892
        %v2941 = vadd.f32 %v2730, %v2895
        %v2942 = vadd.f32 %v2731, %v2900
        %v2943 = vadd.f32 %v2732, %v2903
        %v2944 = vadd.f32 %v2733, %v2908
        %v2945 = vadd.f32 %v2734, %v2911
        %v2946 = vld [vmem:[%s2] sm:$0x1]
        %v2948 = vlaneseq
        %v2949 = vshrl.u32 %v2948, 7
        %v2950 = vsub.s32 0, %v2949
        %v2951 = vrot.slane %v2946, %v2950
        %v2953 = vadd.f32 %v2914, %v2951
        %v2954 = vadd.f32 %v2915, %v2951
        %v2955 = vadd.f32 %v2916, %v2951
        %v2956 = vadd.f32 %v2917, %v2951
        %v2957 = vadd.f32 %v2918, %v2951
        %v2958 = vadd.f32 %v2919, %v2951
        %v2959 = vadd.f32 %v2920, %v2951
        %v2960 = vadd.f32 %v2921, %v2951
        %v2961 = vadd.f32 %v2922, %v2951
        %v2962 = vadd.f32 %v2923, %v2951
        %v2963 = vadd.f32 %v2924, %v2951
        %v2964 = vadd.f32 %v2925, %v2951
        %v2965 = vadd.f32 %v2926, %v2951
        %v2966 = vadd.f32 %v2927, %v2951
        %v2967 = vadd.f32 %v2928, %v2951
        %v2968 = vadd.f32 %v2929, %v2951
        %v2969 = vadd.f32 %v2930, %v2951
        %v2970 = vadd.f32 %v2931, %v2951
        %v2971 = vadd.f32 %v2932, %v2951
        %v2972 = vadd.f32 %v2933, %v2951
        %v2973 = vadd.f32 %v2934, %v2951
        %v2974 = vadd.f32 %v2935, %v2951
        %v2975 = vadd.f32 %v2936, %v2951
        %v2976 = vadd.f32 %v2937, %v2951
        %v2977 = vadd.f32 %v2938, %v2951
        %v2978 = vadd.f32 %v2939, %v2951
        %v2979 = vadd.f32 %v2940, %v2951
        %v2980 = vadd.f32 %v2941, %v2951
        %v2981 = vadd.f32 %v2942, %v2951
        %v2982 = vadd.f32 %v2943, %v2951
        %v2983 = vadd.f32 %v2944, %v2951
        %v2984 = vadd.f32 %v2945, %v2951
        %v2985 = vmax.f32 %v2953, 0.0
        %v2986 = vmax.f32 %v2954, 0.0
        %v2987 = vmax.f32 %v2955, 0.0
        %v2988 = vmax.f32 %v2956, 0.0
        %v2989 = vmax.f32 %v2957, 0.0
        %v2990 = vmax.f32 %v2958, 0.0
        %v2991 = vmax.f32 %v2959, 0.0
        %v2992 = vmax.f32 %v2960, 0.0
        %v2993 = vmax.f32 %v2961, 0.0
        %v2994 = vmax.f32 %v2962, 0.0
        %v2995 = vmax.f32 %v2963, 0.0
        %v2996 = vmax.f32 %v2964, 0.0
        %v2997 = vmax.f32 %v2965, 0.0
        %v2998 = vmax.f32 %v2966, 0.0
        %v2999 = vmax.f32 %v2967, 0.0
        %v3000 = vmax.f32 %v2968, 0.0
        %v3001 = vmax.f32 %v2969, 0.0
        %v3002 = vmax.f32 %v2970, 0.0
        %v3003 = vmax.f32 %v2971, 0.0
        %v3004 = vmax.f32 %v2972, 0.0
        %v3005 = vmax.f32 %v2973, 0.0
        %v3006 = vmax.f32 %v2974, 0.0
        %v3007 = vmax.f32 %v2975, 0.0
        %v3008 = vmax.f32 %v2976, 0.0
        %v3009 = vmax.f32 %v2977, 0.0
        %v3010 = vmax.f32 %v2978, 0.0
        %v3011 = vmax.f32 %v2979, 0.0
        %v3012 = vmax.f32 %v2980, 0.0
        %v3013 = vmax.f32 %v2981, 0.0
        %v3014 = vmax.f32 %v2982, 0.0
        %v3015 = vmax.f32 %v2983, 0.0
        %v3016 = vmax.f32 %v2984, 0.0
        %vm3017 = vcmask 261120
        %v3018 = vsel %vm3017, %v2985, 0.0
        %v3019 = vsel %vm3017, %v2986, 0.0
        %v3020 = vadd.f32 %v3018, %v3019
        %v3021 = vsel %vm3017, %v2987, 0.0
        %v3022 = vadd.f32 %v3020, %v3021
        %v3023 = vsel %vm3017, %v2988, 0.0
        %v3024 = vadd.f32 %v3022, %v3023
        %v3025 = vsel %vm3017, %v2989, 0.0
        %v3026 = vadd.f32 %v3024, %v3025
        %v3027 = vsel %vm3017, %v2990, 0.0
        %v3028 = vadd.f32 %v3026, %v3027
        %v3029 = vsel %vm3017, %v2991, 0.0
        %v3030 = vadd.f32 %v3028, %v3029
        %v3031 = vsel %vm3017, %v2992, 0.0
        %v3032 = vadd.f32 %v3030, %v3031
        %v3033 = vsel %vm3017, %v2993, 0.0
        %v3034 = vadd.f32 %v3032, %v3033
        %v3035 = vsel %vm3017, %v2994, 0.0
        %v3036 = vadd.f32 %v3034, %v3035
        %v3037 = vsel %vm3017, %v2995, 0.0
        %v3038 = vadd.f32 %v3036, %v3037
        %v3039 = vsel %vm3017, %v2996, 0.0
        %v3040 = vadd.f32 %v3038, %v3039
        %v3041 = vsel %vm3017, %v2997, 0.0
        %v3042 = vadd.f32 %v3040, %v3041
        %v3043 = vsel %vm3017, %v2998, 0.0
        %v3044 = vadd.f32 %v3042, %v3043
        %v3045 = vsel %vm3017, %v2999, 0.0
        %v3046 = vadd.f32 %v3044, %v3045
        %v3047 = vsel %vm3017, %v3000, 0.0
        %v3048 = vadd.f32 %v3046, %v3047
        %v3049 = vsel %vm3017, %v3001, 0.0
        %v3050 = vadd.f32 %v3048, %v3049
        %v3051 = vsel %vm3017, %v3002, 0.0
        %v3052 = vadd.f32 %v3050, %v3051
        %v3053 = vsel %vm3017, %v3003, 0.0
        %v3054 = vadd.f32 %v3052, %v3053
        %v3055 = vsel %vm3017, %v3004, 0.0
        %v3056 = vadd.f32 %v3054, %v3055
        %v3057 = vsel %vm3017, %v3005, 0.0
        %v3058 = vadd.f32 %v3056, %v3057
        %v3059 = vsel %vm3017, %v3006, 0.0
        %v3060 = vadd.f32 %v3058, %v3059
        %v3061 = vsel %vm3017, %v3007, 0.0
        %v3062 = vadd.f32 %v3060, %v3061
        %v3063 = vsel %vm3017, %v3008, 0.0
        %v3064 = vadd.f32 %v3062, %v3063
        %v3065 = vsel %vm3017, %v3009, 0.0
        %v3066 = vadd.f32 %v3064, %v3065
        %v3067 = vsel %vm3017, %v3010, 0.0
        %v3068 = vadd.f32 %v3066, %v3067
        %v3069 = vsel %vm3017, %v3011, 0.0
        %v3070 = vadd.f32 %v3068, %v3069
        %v3071 = vsel %vm3017, %v3012, 0.0
        %v3072 = vadd.f32 %v3070, %v3071
        %v3073 = vsel %vm3017, %v3013, 0.0
        %v3074 = vadd.f32 %v3072, %v3073
        %v3075 = vsel %vm3017, %v3014, 0.0
        %v3076 = vadd.f32 %v3074, %v3075
        %v3077 = vsel %vm3017, %v3015, 0.0
        %v3078 = vadd.f32 %v3076, %v3077
        %v3079 = vsel %vm3017, %v3016, 0.0
        %v3080 = vadd.f32 %v3078, %v3079
        %v3081 = vrot.slane %v3080, 4
        %v3082 = vadd.f32 %v3080, %v3081
        %v3083 = vrot.slane %v3082, 2
        %v3084 = vadd.f32 %v3082, %v3083
        %v3085 = vrot.slane %v3084, 1
        %v3086 = vadd.f32 %v3084, %v3085
        %v3087 = vmul.f32 %v3086, 0.00390625
        %v3088 = vld [vmem:[%s3] sm:$0xff]
        %v3089 = vld [vmem:[%s3 + $0x8] sm:$0xff]
        %v3090 = vld [vmem:[%s3 + $0x10] sm:$0xff]
        %v3091 = vld [vmem:[%s3 + $0x18] sm:$0xff]
        %v3092 = vld [vmem:[%s4] sm:$0x1]
        %v3094 = vsel %vm3017, %v3087, 0
        %3096 = vmatprep.subr.mxu0 0.0
        %3097 = vmatpush1.msra.mxu0 0.0
        %3098 = vmatprep.subr.mxu0 0.0
        %3099 = vmatpush1.msra.mxu0 0.0
        %3100 = vmatprep.subr.mxu0 0.0
        %3101 = vmatpush1.msra.mxu0 0.0
        %3102 = vmatprep.subr.mxu0 0.0
        %3103 = vmatpush1.msra.mxu0 0.0
        %3104 = vmatprep.subr.mxu0 0.0
        %3105 = vmatpush1.msra.mxu0 0.0
        %3106 = vmatprep.subr.mxu0 0.0
        %3107 = vmatpush1.msra.mxu0 0.0
        %3108 = vmatprep.subr.mxu0 0.0
        %3109 = vmatpush1.msra.mxu0 0.0
        %3110 = vmatprep.subr.mxu0 0.0
        %3111 = vmatpush1.msra.mxu0 0.0
        %3112 = vmatprep.subr.mxu0 0.0
        %3113 = vmatpush1.msra.mxu0 0.0
        %3114 = vmatprep.subr.mxu0 0.0
        %3115 = vmatpush1.msra.mxu0 0.0
        %3116 = vmatprep.subr.mxu0 0.0
        %3117 = vmatpush1.msra.mxu0 0.0
        %3118 = vmatprep.subr.mxu0 0.0
        %3119 = vmatpush1.msra.mxu0 0.0
        %3120 = vmatprep.subr.mxu0 0.0
        %3121 = vmatpush1.msra.mxu0 %v3091
        %3122 = vmatprep.subr.mxu0 0.0
        %3123 = vmatpush1.msra.mxu0 %v3090
        %3124 = vmatprep.subr.mxu0 0.0
        %3125 = vmatpush1.msra.mxu0 %v3089
        %3126 = vmatprep.subr.mxu0 0.0
        %3127 = vmatpush1.msra.mxu0 %v3088
        %3128 = vmatprep.subr.mxu0 0.0
        %3129 = vmatpush2.msra.mxu0 0.0
        %3130 = vmatprep.subr.mxu0 0.0
        %3131 = vmatpush2.msra.mxu0 0.0
        %3132 = vmatprep.subr.mxu0 0.0
        %3133 = vmatpush2.msra.mxu0 0.0
        %3134 = vmatprep.subr.mxu0 0.0
        %3135 = vmatpush2.msra.mxu0 0.0
        %3136 = vmatprep.subr.mxu0 0.0
        %3137 = vmatpush2.msra.mxu0 0.0
        %3138 = vmatprep.subr.mxu0 0.0
        %3139 = vmatpush2.msra.mxu0 0.0
        %3140 = vmatprep.subr.mxu0 0.0
        %3141 = vmatpush2.msra.mxu0 0.0
        %3142 = vmatprep.subr.mxu0 0.0
        %3143 = vmatpush2.msra.mxu0 0.0
        %3144 = vmatprep.subr.mxu0 0.0
        %3145 = vmatpush2.msra.mxu0 0.0
        %3146 = vmatprep.subr.mxu0 0.0
        %3147 = vmatpush2.msra.mxu0 0.0
        %3148 = vmatprep.subr.mxu0 0.0
        %3149 = vmatpush2.msra.mxu0 0.0
        %3150 = vmatprep.subr.mxu0 0.0
        %3151 = vmatpush2.msra.mxu0 0.0
        %3152 = vmatprep.subr.mxu0 0.0
        %3153 = vmatpush2.msra.mxu0 0.0
        %3154 = vmatprep.subr.mxu0 0.0
        %3155 = vmatpush2.msra.mxu0 0.0
        %3156 = vmatprep.subr.mxu0 0.0
        %3157 = vmatpush2.msra.mxu0 0.0
        %3158 = vmatprep.subr.mxu0 0.0
        %3159 = vmatpush2.msra.mxu0 0.0
        %3160 = vmatprep.mubr.f32.mxu0 0.0
        %3161 = vmatmul.mubr.f32.gmra.mxu0 %v3094
        %v3162 = vpop.f32.mrf.mxu0
        %v3163 = vadd.f32 %v3092, %v3162
        %v3164 = vpop.f32.mrf.mxu0
        %3165 = vdwg.mxu0
        %vm3166 = vcmask 1040384
        %v3167 = vsel %vm3166, %v3163, -inf
        %3168 = vmax.xlane.f32.xlu0 %v3167
        %v3169 = vpop.xlane.xlu0 %3168
        %v3170 = vsub.f32 %v3163, %v3169
        %v3171 = vmul.f32 %v3170, 1.442695
        %v3172 = vpow.pop %v3171
        %v3173 = vsel %vm3166, %v3172, 0.0
        %3174 = vadd.xlane.f32.xlu0 %v3173
        %v3175 = vpop.xlane.xlu0 %3174
        %v3176 = vrcp.pop %v3175
        %v3177 = vmul.f32 %v3172, %v3176
        %3178 = vst [vmem:[%s216] sm:$0x1] %v3177
        %s3179 = sand.u32 %s137, 1
        %s3180 = scalar_lea.sflag [#allocation3], %s3179
        %s3181 = sand.u32 %s137, 1
        %s3182 = scalar_lea.vmem [#allocation2], %s3181
        // Predicated region
        $region41: #{_model.1} parent=39 // pred_check
          %p3183 = pneg %p147
        $region42: #{_model.1} parent=39 // pred_check_branch
          %3185 = sbr.rel (%p3183) target = $region44
        $region43: #{_model.1} parent=39 // pred_region
          %s3187 = ssub.s32 16, 16
          %3188 = vsyncadd %s3180, %s3187
          %s3189 = smul.addr %s19, 16
          %s3190 = scalar_lea.hbm %s5, %s3189
          %s3192 = sshll.u32 %s3182, 4
          %s3193 = int_to_ptr.vmem [resolvable:$true] %s3192
          %3195 = dma.vmem_to_hbm [thread:$0]  %s3193, 16, %s3190, %s3180
        $region44: #{_model.1} parent=39 // pred_fallthru
          _
      $region40: #{_model.1} parent=5 // pred_fallthru
        _
      %p3196 = scmp.le.s32.totalorder 2, %s14
      // Predicated region
      $region45: #{_model.1} parent=5 // pred_check
        %p3197 = pneg %p3196
      $region46: #{_model.1} parent=5 // pred_check_branch
        %3199 = sbr.rel (%p3197) target = $region48
      $region47: #{_model.1} parent=5 // pred_region
        %s3200 = ssub.s32 %s14, 2
        // Predicated region
        $region49: #{_model.1} parent=47 // pred_check
          %p3201 = pneg %p153
        $region50: #{_model.1} parent=47 // pred_check_branch
          %3203 = sbr.rel (%p3201) target = $region52
        $region51: #{_model.1} parent=47 // pred_region
          %s3204 = sand.u32 %s138, 1
          %s3205 = scalar_lea.sflag [#allocation3], %s3204
          %s3206 = sand.u32 %s138, 1
          %s3207 = scalar_lea.vmem [#allocation2], %s3206
          %3208 = dma.done %s3205, 16
        $region52: #{_model.1} parent=47 // pred_fallthru
          _
      $region48: #{_model.1} parent=5 // pred_fallthru
        _
    $region6: #{_model.1} parent=1 // loop_footer
      %s18 = sadd.s32 1, %s14
    $region7: #{_model.1} parent=1 // loop_footer_branch
      %13 = sbr.rel target = $region3
    $region8: #{_model.1} parent=1 // loop_exit
      _
    %3209 = vsyncpa [#allocation3], 1
    %s3210 = scalar_lea.sflag [#allocation3], 1
    %3211 = vsyncpa %s3210, 1

</llo_original>
